<compile_context>
chip_gen: v5e
topology: v5e:2x2
jax: 0.10.0
libtpu: 0.0.40
codegen_flags: <defaults>
</compile_context>

<pallas_src>
import functools

import jax
import jax.numpy as jnp
from jax import lax
from jax.experimental import pallas as pl
from jax.experimental.pallas import tpu as pltpu

_BN_EPS = 1e-5
_LANES = 128


def _round_up(x, m):
    return (x + m - 1) // m * m


def _fold_bn(gamma, beta, mean, var):
    """Eval-mode BN -> per-channel (scale, bias), unpadded f32."""
    scale = gamma / jnp.sqrt(var + _BN_EPS)
    bias = beta - mean * scale
    return scale.astype(jnp.float32), bias.astype(jnp.float32)


def _invres_kernel(x_hbm, w1_ref, dw_ref, b2_ref, w3_ref, b3_ref, o_ref,
                   xbuf, sem, *, stride, tile_rows, Wo, use_res):
    n = pl.program_id(0)
    t = pl.program_id(1)
    num_tiles = pl.num_programs(1)

    _, rows_in, wp, cin_p = xbuf.shape        # rows_in = stride*tile_rows + 2 (halo)
    cexp_p = w1_ref.shape[1]
    cout_p = w3_ref.shape[1]
    to = tile_rows
    wo = Wo

    row0 = t * (to * stride)                  # first padded input row of this tile

    def x_copy(row_start, slot):
        return pltpu.make_async_copy(
            x_hbm.at[n, pl.ds(row_start, rows_in)], xbuf.at[slot], sem.at[slot])

    slot = t % 2

    # Prime the double buffer at the first row-tile of every image (safe under
    # a megacore split of the batch axis).
    @pl.when(t == 0)
    def _():
        x_copy(row0, slot).start()

    # Issue the next-tile prefetch BEFORE waiting on the current tile: both
    # slabs are in flight during the first tile's compute, and scalar address
    # reads stay ahead of the .wait().
    @pl.when(t + 1 < num_tiles)
    def _():
        x_copy(row0 + to * stride, 1 - slot).start()

    x_copy(row0, slot).wait()

    x_tile = xbuf[slot]                                      # (rows_in, wp, cin_p)

    # ---- 1x1 expand conv (MXU, f32 accumulation) + folded BN + ReLU6 --------
    # BN scale is folded into w1's columns; BN bias rides on the indicator
    # channel (lane Cin of the input), so padded halo pixels come out exactly 0
    # after ReLU6 and no interior mask is needed.
    t_act = jnp.dot(x_tile.reshape(rows_in * wp, cin_p), w1_ref[...],
                    preferred_element_type=jnp.float32)
    t_act = jnp.clip(t_act, 0.0, 6.0).reshape(rows_in, wp, cexp_p)

    # ---- 3x3 depthwise conv (VPU, f32; BN scale folded into taps) -----------
    acc = jnp.zeros((to, wo, cexp_p), jnp.float32)
    if stride == 1:
        for ky in range(3):
            for kx in range(3):
                win = lax.slice(t_act, (ky, kx, 0), (ky + to, kx + wo, cexp_p))
                acc = acc + win * dw_ref[3 * ky + kx]
    else:
        # Deinterleave even/odd columns then even/odd rows ONCE (instead of
        # reshape-subsampling inside all nine taps); each tap is then a
        # contiguous slice of the matching parity plane.
        tc = t_act.reshape(rows_in, wp // 2, 2, cexp_p)
        col_planes = (tc[:, :, 0, :], tc[:, :, 1, :])        # (rows_in, wp//2, C)
        planes = []
        for cp in col_planes:
            rp = cp.reshape(rows_in // 2, 2, wp // 2, cexp_p)
            planes.append((rp[:, 0], rp[:, 1]))              # (rows_in//2, wp//2, C)
        for ky in range(3):
            for kx in range(3):
                p = planes[kx % 2][ky % 2]
                win = lax.slice(p, (ky // 2, kx // 2, 0),
                                (ky // 2 + to, kx // 2 + wo, cexp_p))
                acc = acc + win * dw_ref[3 * ky + kx]
    acc = jnp.clip(acc + b2_ref[...], 0.0, 6.0)

    # ---- 1x1 project conv (MXU, f32 accumulation) + folded BN ----------------
    y = jnp.dot(acc.reshape(to * wo, cexp_p).astype(w3_ref.dtype), w3_ref[...],
                preferred_element_type=jnp.float32)
    y = y + b3_ref[...]

    if use_res:                                # stride == 1 and Cin == Cout
        # TODO(synk): residual uses the compute_dtype copy of x (bf16 when
        # compute_dtype=bf16); keep an f32 copy if tighter skip accuracy needed.
        xr = lax.slice(x_tile, (1, 1, 0), (1 + to, 1 + wo, cin_p))
        y = y + xr.reshape(to * wo, cin_p)[:, :cout_p].astype(jnp.float32)

    # Flat lane-dense output block: no sublane relayout even when Wo % 8 != 0.
    o_ref[...] = y.reshape(1, to * wo, cout_p).astype(o_ref.dtype)


def inv_res_bottleneck_pallas(x_nchw, w1, dw, w3, bn1, bn2, bn3, stride,
                              *, compute_dtype=jnp.bfloat16, tile_rows=None,
                              out_dtype=jnp.float32):
    """x_nchw: (N, Cin, H, W); conv weights in PyTorch layouts.

    compute_dtype: dtype of activations / 1x1-conv weights fed to the MXU
    (accumulation, depthwise taps and biases stay float32).
    """
    N, Cin, H, W = x_nchw.shape
    Cexp = w1.shape[0]
    Cout = w3.shape[0]
    use_res = (stride == 1 and Cin == Cout)
    Ho = (H - 1) // stride + 1
    Wo = (W - 1) // stride + 1

    cin_p = _round_up(Cin + 1, _LANES)       # +1: BN-bias indicator channel
    cexp_p = _round_up(Cexp, _LANES)
    cout_p = _round_up(Cout, _LANES)

    # Padded spatial footprint of the HBM input (halo of 1 on each side; W
    # rounded to a multiple of 8 so in-kernel reshapes stay sublane-aligned).
    Hp = max(H + 2, stride * Ho + 2)
    Wp = _round_up(max(W + 2, stride * Wo + 2), 8)

    # --- chip VMEM and tile-size budget --------------------------------------
    try:
        vmem_cap = int(pltpu.get_tpu_info().vmem_capacity_bytes)
    except Exception:
        vmem_cap = 64 * 1024 * 1024          # conservative (v7x per-TC) fallback
    vmem_ceiling = int(vmem_cap * 3 // 4)

    bytes_cd = jnp.dtype(compute_dtype).itemsize
    bytes_out = jnp.dtype(out_dtype).itemsize

    def _vmem_est(tr):
        rows_in = stride * tr + 2
        return (2 * rows_in * Wp * cin_p * bytes_cd               # x double buffer
                + 2 * tr * Wo * cout_p * bytes_out                # out double buffer
                + rows_in * Wp * cexp_p * 4                       # expanded slab (f32)
                + 2 * tr * Wo * cexp_p * 4                        # dw acc + proj input
                + 2 * (cin_p * cexp_p + cexp_p * cout_p) * bytes_cd   # 1x1 weights
                + 2 * (11 * cexp_p + cout_p) * 4)                 # dw taps + biases

    if tile_rows is None:
        # Largest divisor of Ho under ~4096 output pixels per grid step that
        # keeps the per-step VMEM estimate inside ~60% of the scoped limit and
        # gives sublane-aligned flat output blocks.
        budget = int(vmem_ceiling * 0.6)
        target_px = 4096
        cands = [d for d in range(1, Ho + 1)
                 if Ho % d == 0 and ((d * Wo) % 8 == 0 or d == Ho)
                 and _vmem_est(d) <= budget]
        if not cands:
            cands = [Ho]
        under = [d for d in cands if d * Wo <= target_px]
        tile_rows = max(under) if under else min(cands)

    assert Ho % tile_rows == 0, (Ho, tile_rows)
    assert (tile_rows * Wo) % 8 == 0 or tile_rows == Ho, (tile_rows, Wo)
    num_tiles = Ho // tile_rows
    rows_in = stride * tile_rows + 2

    vmem_limit = min(max(2 * _vmem_est(tile_rows), 32 * 1024 * 1024), vmem_ceiling)
    vmem_limit = max(vmem_limit, _vmem_est(tile_rows) + (4 << 20))

    # --- fold BN into weights / biases ---------------------------------------
    s1, b1 = _fold_bn(*bn1)
    s2, b2 = _fold_bn(*bn2)
    s3, b3 = _fold_bn(*bn3)

    w1_m = jnp.zeros((cin_p, cexp_p), jnp.float32)
    w1_m = w1_m.at[:Cin, :Cexp].set(w1.reshape(Cexp, Cin).T * s1[None, :])
    w1_m = w1_m.at[Cin, :Cexp].set(b1)            # bias row hit by the indicator
    w1_m = w1_m.astype(compute_dtype)

    dw_m = jnp.zeros((9, 1, cexp_p), jnp.float32).at[:, 0, :Cexp].set(
        dw.reshape(Cexp, 9).T * s2[None, :])
    b2_m = jnp.zeros((1, cexp_p), jnp.float32).at[0, :Cexp].set(b2)

    w3_m = jnp.zeros((cexp_p, cout_p), jnp.float32).at[:Cexp, :Cout].set(
        w3.reshape(Cout, Cexp).T * s3[None, :]).astype(compute_dtype)
    b3_m = jnp.zeros((1, cout_p), jnp.float32).at[0, :Cout].set(b3)

    # --- spatially pre-padded, channel-padded NHWC input (stays in HBM) ------
    x = jnp.transpose(x_nchw, (0, 2, 3, 1))
    ind = jnp.ones((N, H, W, 1), x.dtype)          # BN-bias indicator channel
    x = jnp.concatenate([x, ind], axis=-1)
    x = jnp.pad(x, ((0, 0), (1, Hp - H - 1), (1, Wp - W - 1),
                    (0, cin_p - Cin - 1)))
    x = x.astype(compute_dtype)

    kernel = functools.partial(_invres_kernel, stride=stride, tile_rows=tile_rows,
                               Wo=Wo, use_res=use_res)

    def _const(arr):
        shape = arr.shape
        return pl.BlockSpec(shape, lambda n, t: (0,) * len(shape))

    out = pl.pallas_call(
        kernel,
        out_shape=jax.ShapeDtypeStruct((N, Ho * Wo, cout_p), out_dtype),
        grid=(N, num_tiles),
        in_specs=[
            pl.BlockSpec(memory_space=pl.ANY),                   # x stays in HBM
            _const(w1_m), _const(dw_m), _const(b2_m),
            _const(w3_m), _const(b3_m),
        ],
        out_specs=pl.BlockSpec((1, tile_rows * Wo, cout_p),
                               lambda n, t: (n, t, 0)),
        scratch_shapes=[
            pltpu.VMEM((2, rows_in, Wp, cin_p), compute_dtype),
            pltpu.SemaphoreType.DMA((2,)),
        ],
        compiler_params=pltpu.CompilerParams(
            dimension_semantics=("parallel", "arbitrary"),
            vmem_limit_bytes=int(vmem_limit)),
    )(x, w1_m, dw_m, b2_m, w3_m, b3_m)

    # Drop channel padding, flat -> NHWC -> NCHW to match the PyTorch interface.
    out = out.reshape(N, Ho, Wo, cout_p)[..., :Cout]
    return jnp.transpose(out, (0, 3, 1, 2)).astype(x_nchw.dtype)


def inv_res_bottleneck_ref(x, w1, dw, w3, bn1, bn2, bn3, stride):
    """Pure-JAX reference (NCHW) via lax.conv_general_dilated."""
    def bn(y, p):
        g, b, m, v = (t[None, :, None, None] for t in p)
        return (y - m) / jnp.sqrt(v + _BN_EPS) * g + b

    dn = ('NCHW', 'OIHW', 'NCHW')
    y = lax.conv_general_dilated(x, w1, (1, 1), 'VALID', dimension_numbers=dn)
    y = jnp.clip(bn(y, bn1), 0.0, 6.0)
    y = lax.conv_general_dilated(y, dw, (stride, stride), ((1, 1), (1, 1)),
                                 dimension_numbers=dn,
                                 feature_group_count=dw.shape[0])
    y = jnp.clip(bn(y, bn2), 0.0, 6.0)
    y = lax.conv_general_dilated(y, w3, (1, 1), 'VALID', dimension_numbers=dn)
    y = bn(y, bn3)
    use_res = (stride == 1 and x.shape[1] == w3.shape[0])
    return x + y if use_res else y


if __name__ == "__main__":
    def bn_params(k, C):
        k1, k2, k3, k4 = jax.random.split(k, 4)
        gamma = 1.0 + 0.1 * jax.random.normal(k1, (C,), jnp.float32)
        beta = 0.1 * jax.random.normal(k2, (C,), jnp.float32)
        mean = 0.1 * jax.random.normal(k3, (C,), jnp.float32)
        var = jax.random.uniform(k4, (C,), jnp.float32, minval=0.5, maxval=1.5)
        return gamma, beta, mean, var

    def make_case(key, N, insize, outsize, expfact, H, W):
        Cexp = insize * expfact
        ks = jax.random.split(key, 7)
        x = jax.random.normal(ks[0], (N, insize, H, W), jnp.float32)
        w1 = 0.3 * jax.random.normal(ks[1], (Cexp, insize, 1, 1), jnp.float32)
        dw = 0.3 * jax.random.normal(ks[2], (Cexp, 1, 3, 3), jnp.float32)
        w3 = 0.3 * jax.random.normal(ks[3], (outsize, Cexp, 1, 1), jnp.float32)
        return (x, w1, dw, w3, bn_params(ks[4], Cexp), bn_params(ks[5], Cexp),
                bn_params(ks[6], outsize))

    key = jax.random.PRNGKey(0)
    k1, k2 = jax.random.split(key)

    # Case 1: stride 1 with residual (insize == outsize); tile_rows=8 exercises
    # the multi-tile double-buffered DMA path in f32.
    args1 = make_case(k1, N=2, insize=4, outsize=4, expfact=4, H=16, W=16)
    ref1 = inv_res_bottleneck_ref(*args1, stride=1)

    out1_f32 = jax.block_until_ready(inv_res_bottleneck_pallas(
        *args1, stride=1, compute_dtype=jnp.float32, tile_rows=8))
    assert out1_f32.shape == ref1.shape, (out1_f32.shape, ref1.shape)
    assert jnp.allclose(out1_f32, ref1, rtol=1e-4, atol=2e-4), float(
        jnp.max(jnp.abs(out1_f32 - ref1)))

    # Same case in bf16 with the VMEM-budget tile heuristic (single tile).
    out1_bf16 = jax.block_until_ready(inv_res_bottleneck_pallas(
        *args1, stride=1, compute_dtype=jnp.bfloat16))
    bf16_err = float(jnp.max(jnp.abs(out1_bf16 - ref1)))
    bf16_tol = 0.1 + 0.05 * float(jnp.max(jnp.abs(ref1)))
    assert bf16_err < bf16_tol, (bf16_err, bf16_tol)

    # Case 2: stride 2, no residual (downsampling block); exercises the 2x2
    # parity-plane depthwise path with two row tiles.
    args2 = make_case(k2, N=2, insize=4, outsize=8, expfact=4, H=16, W=16)
    ref2 = inv_res_bottleneck_ref(*args2, stride=2)
    out2 = jax.block_until_ready(inv_res_bottleneck_pallas(
        *args2, stride=2, compute_dtype=jnp.float32, tile_rows=4))
    assert out2.shape == ref2.shape, (out2.shape, ref2.shape)
    assert jnp.allclose(out2, ref2, rtol=1e-4, atol=2e-4), float(
        jnp.max(jnp.abs(out2 - ref2)))

    print("KERNEL_OK")
</pallas_src>

<mosaic_0001>
module attributes {stable_mosaic.version = 11 : i64} {
  func.func @_invres_kernel(%arg0: i32, %arg1: i32, %arg2: memref<2x18x24x128xf32, #tpu.memory_space<any>>, %arg3: memref<128x128xf32, #tpu.memory_space<vmem>>, %arg4: memref<9x1x128xf32, #tpu.memory_space<vmem>>, %arg5: memref<1x128xf32, #tpu.memory_space<vmem>>, %arg6: memref<128x128xf32, #tpu.memory_space<vmem>>, %arg7: memref<1x128xf32, #tpu.memory_space<vmem>>, %arg8: memref<1x128x128xf32, #tpu.memory_space<vmem>>, %arg9: memref<2x10x24x128xf32, #tpu.memory_space<vmem>>, %arg10: memref<2x!tpu.dma_semaphore, #tpu.memory_space<semaphore_mem>>) attributes {dimension_semantics = [#tpu.dimension_semantics<parallel>, #tpu.dimension_semantics<arbitrary>], iteration_bounds = array<i64: 2, 2>, scalar_prefetch = 0 : i64, scratch_operands = 2 : i64, tpu.core_type = #tpu.core_type<tc>, window_params = [{}, {pipeline_mode = #tpu.pipeline_mode<synchronous>, transform_indices = @transform_1, window_bounds = array<i64: 128, 128>}, {pipeline_mode = #tpu.pipeline_mode<synchronous>, transform_indices = @transform_2, window_bounds = array<i64: 9, 1, 128>}, {pipeline_mode = #tpu.pipeline_mode<synchronous>, transform_indices = @transform_3, window_bounds = array<i64: 1, 128>}, {pipeline_mode = #tpu.pipeline_mode<synchronous>, transform_indices = @transform_4, window_bounds = array<i64: 128, 128>}, {pipeline_mode = #tpu.pipeline_mode<synchronous>, transform_indices = @transform_5, window_bounds = array<i64: 1, 128>}, {transform_indices = @transform_6, window_bounds = array<i64: 1, 128, 128>}]} {
    %c8_i32 = arith.constant 8 : i32
    %0 = arith.muli %arg1, %c8_i32 : i32
    %c2_i32 = arith.constant 2 : i32
    %c0_i32 = arith.constant 0 : i32
    %1 = arith.cmpi eq, %c2_i32, %c0_i32 : i32
    %c1_i32 = arith.constant 1 : i32
    %2 = arith.select %1, %c1_i32, %c2_i32 : i32
    %3 = arith.remsi %arg1, %2 : i32
    %c0_i32_0 = arith.constant 0 : i32
    %4 = arith.cmpi ne, %3, %c0_i32_0 : i32
    %c0_i32_1 = arith.constant 0 : i32
    %5 = arith.cmpi slt, %3, %c0_i32_1 : i32
    %c0_i32_2 = arith.constant 0 : i32
    %6 = arith.cmpi slt, %2, %c0_i32_2 : i32
    %7 = arith.xori %5, %6 : i1
    %8 = arith.andi %7, %4 : i1
    %9 = arith.addi %3, %2 : i32
    %10 = arith.select %8, %9, %3 : i32
    %c0_i32_3 = arith.constant 0 : i32
    %11 = arith.cmpi eq, %arg1, %c0_i32_3 : i32
    %12 = arith.extui %11 : i1 to i32
    %c0_i32_4 = arith.constant 0 : i32
    %13 = arith.cmpi ne, %12, %c0_i32_4 : i32
    scf.if %13 {
      %c0_i32_51 = arith.constant 0 : i32
      %c0_i32_52 = arith.constant 0 : i32
      %118 = tpu.memref_slice %arg2[%arg0, %0, %c0_i32_51, %c0_i32_52] : memref<2x18x24x128xf32, #tpu.memory_space<any>> -> memref<1x10x24x128xf32, #tpu.memory_space<any>>
      %119 = tpu.memref_squeeze %118 : memref<1x10x24x128xf32, #tpu.memory_space<any>> -> memref<10x24x128xf32, #tpu.memory_space<any>>
      %c0_i32_53 = arith.constant 0 : i32
      %c0_i32_54 = arith.constant 0 : i32
      %c0_i32_55 = arith.constant 0 : i32
      %120 = tpu.memref_slice %arg9[%10, %c0_i32_53, %c0_i32_54, %c0_i32_55] : memref<2x10x24x128xf32, #tpu.memory_space<vmem>> -> memref<1x10x24x128xf32, #tpu.memory_space<vmem>>
      %121 = tpu.memref_squeeze %120 : memref<1x10x24x128xf32, #tpu.memory_space<vmem>> -> memref<10x24x128xf32, #tpu.memory_space<vmem>>
      %122 = tpu.memref_slice %arg10[%10] : memref<2x!tpu.dma_semaphore, #tpu.memory_space<semaphore_mem>> -> memref<1x!tpu.dma_semaphore, #tpu.memory_space<semaphore_mem>>
      %123 = tpu.memref_squeeze %122 : memref<1x!tpu.dma_semaphore, #tpu.memory_space<semaphore_mem>> -> memref<!tpu.dma_semaphore, #tpu.memory_space<semaphore_mem>>
      tpu.enqueue_dma source(%119 : memref<10x24x128xf32, #tpu.memory_space<any>>) target(%121 : memref<10x24x128xf32, #tpu.memory_space<vmem>>) target_semaphore(%123 : memref<!tpu.dma_semaphore, #tpu.memory_space<semaphore_mem>>)
    } else {
    }
    %c1_i32_5 = arith.constant 1 : i32
    %14 = arith.addi %arg1, %c1_i32_5 : i32
    %c2_i32_6 = arith.constant 2 : i32
    %15 = arith.cmpi slt, %14, %c2_i32_6 : i32
    %16 = arith.extui %15 : i1 to i32
    %c0_i32_7 = arith.constant 0 : i32
    %17 = arith.cmpi ne, %16, %c0_i32_7 : i32
    scf.if %17 {
      %c8_i32_51 = arith.constant 8 : i32
      %118 = arith.addi %0, %c8_i32_51 : i32
      %c1_i32_52 = arith.constant 1 : i32
      %119 = arith.subi %c1_i32_52, %10 : i32
      %c0_i32_53 = arith.constant 0 : i32
      %c0_i32_54 = arith.constant 0 : i32
      %120 = tpu.memref_slice %arg2[%arg0, %118, %c0_i32_53, %c0_i32_54] : memref<2x18x24x128xf32, #tpu.memory_space<any>> -> memref<1x10x24x128xf32, #tpu.memory_space<any>>
      %121 = tpu.memref_squeeze %120 : memref<1x10x24x128xf32, #tpu.memory_space<any>> -> memref<10x24x128xf32, #tpu.memory_space<any>>
      %c0_i32_55 = arith.constant 0 : i32
      %c0_i32_56 = arith.constant 0 : i32
      %c0_i32_57 = arith.constant 0 : i32
      %122 = tpu.memref_slice %arg9[%119, %c0_i32_55, %c0_i32_56, %c0_i32_57] : memref<2x10x24x128xf32, #tpu.memory_space<vmem>> -> memref<1x10x24x128xf32, #tpu.memory_space<vmem>>
      %123 = tpu.memref_squeeze %122 : memref<1x10x24x128xf32, #tpu.memory_space<vmem>> -> memref<10x24x128xf32, #tpu.memory_space<vmem>>
      %124 = tpu.memref_slice %arg10[%119] : memref<2x!tpu.dma_semaphore, #tpu.memory_space<semaphore_mem>> -> memref<1x!tpu.dma_semaphore, #tpu.memory_space<semaphore_mem>>
      %125 = tpu.memref_squeeze %124 : memref<1x!tpu.dma_semaphore, #tpu.memory_space<semaphore_mem>> -> memref<!tpu.dma_semaphore, #tpu.memory_space<semaphore_mem>>
      tpu.enqueue_dma source(%121 : memref<10x24x128xf32, #tpu.memory_space<any>>) target(%123 : memref<10x24x128xf32, #tpu.memory_space<vmem>>) target_semaphore(%125 : memref<!tpu.dma_semaphore, #tpu.memory_space<semaphore_mem>>)
    } else {
    }
    %c0_i32_8 = arith.constant 0 : i32
    %c0_i32_9 = arith.constant 0 : i32
    %18 = tpu.memref_slice %arg2[%arg0, %0, %c0_i32_8, %c0_i32_9] : memref<2x18x24x128xf32, #tpu.memory_space<any>> -> memref<1x10x24x128xf32, #tpu.memory_space<any>>
    %19 = tpu.memref_squeeze %18 : memref<1x10x24x128xf32, #tpu.memory_space<any>> -> memref<10x24x128xf32, #tpu.memory_space<any>>
    %c0_i32_10 = arith.constant 0 : i32
    %c0_i32_11 = arith.constant 0 : i32
    %c0_i32_12 = arith.constant 0 : i32
    %20 = tpu.memref_slice %arg9[%10, %c0_i32_10, %c0_i32_11, %c0_i32_12] : memref<2x10x24x128xf32, #tpu.memory_space<vmem>> -> memref<1x10x24x128xf32, #tpu.memory_space<vmem>>
    %21 = tpu.memref_squeeze %20 : memref<1x10x24x128xf32, #tpu.memory_space<vmem>> -> memref<10x24x128xf32, #tpu.memory_space<vmem>>
    %22 = tpu.memref_slice %arg10[%10] : memref<2x!tpu.dma_semaphore, #tpu.memory_space<semaphore_mem>> -> memref<1x!tpu.dma_semaphore, #tpu.memory_space<semaphore_mem>>
    %23 = tpu.memref_squeeze %22 : memref<1x!tpu.dma_semaphore, #tpu.memory_space<semaphore_mem>> -> memref<!tpu.dma_semaphore, #tpu.memory_space<semaphore_mem>>
    tpu.wait_dma2 semaphore(%23 : memref<!tpu.dma_semaphore, #tpu.memory_space<semaphore_mem>>) src(%19 : memref<10x24x128xf32, #tpu.memory_space<any>>) dst(%21 : memref<10x24x128xf32, #tpu.memory_space<vmem>>)
    %24 = arith.index_cast %10 : i32 to index
    %c0 = arith.constant 0 : index
    %c0_13 = arith.constant 0 : index
    %c0_14 = arith.constant 0 : index
    %25 = vector.load %arg9[%24, %c0, %c0_13, %c0_14] : memref<2x10x24x128xf32, #tpu.memory_space<vmem>>, vector<1x10x24x128xf32>
    %26 = vector.shape_cast %25 : vector<1x10x24x128xf32> to vector<10x24x128xf32>
    %27 = vector.shape_cast %26 : vector<10x24x128xf32> to vector<240x128xf32>
    %c0_15 = arith.constant 0 : index
    %c0_16 = arith.constant 0 : index
    %28 = vector.load %arg3[%c0_15, %c0_16] : memref<128x128xf32, #tpu.memory_space<vmem>>, vector<128x128xf32>
    %cst = arith.constant dense<0.000000e+00> : vector<240x128xf32>
    %29 = tpu.matmul %27, %28, %cst {dimension_numbers = #tpu.dot_dimension_numbers<[1], [0], [0], [1], [0, 0, 1, 1], [], []>} : vector<240x128xf32>, vector<128x128xf32>, vector<240x128xf32> -> vector<240x128xf32>
    %cst_17 = arith.constant 0.000000e+00 : f32
    %cst_18 = arith.constant 6.000000e+00 : f32
    %30 = vector.broadcast %cst_17 : f32 to vector<240x128xf32>
    %31 = arith.maximumf %30, %29 : vector<240x128xf32>
    %32 = vector.broadcast %cst_18 : f32 to vector<240x128xf32>
    %33 = arith.minimumf %32, %31 : vector<240x128xf32>
    %34 = vector.shape_cast %33 : vector<240x128xf32> to vector<10x24x128xf32>
    %cst_19 = arith.constant 0.000000e+00 : f32
    %35 = vector.broadcast %cst_19 : f32 to vector<8x16x128xf32>
    %36 = vector.extract_strided_slice %34 {offsets = [0, 0, 0], sizes = [8, 16, 128], strides = [1, 1, 1]} : vector<10x24x128xf32> to vector<8x16x128xf32>
    %c0_20 = arith.constant 0 : index
    %c0_21 = arith.constant 0 : index
    %c0_22 = arith.constant 0 : index
    %37 = vector.load %arg4[%c0_20, %c0_21, %c0_22] : memref<9x1x128xf32, #tpu.memory_space<vmem>>, vector<1x1x128xf32>
    %38 = vector.shape_cast %37 : vector<1x1x128xf32> to vector<1x128xf32>
    %39 = vector.shape_cast %38 : vector<1x128xf32> to vector<1x1x128xf32>
    %40 = vector.broadcast %39 : vector<1x1x128xf32> to vector<8x16x128xf32>
    %41 = arith.mulf %36, %40 : vector<8x16x128xf32>
    %42 = arith.addf %35, %41 : vector<8x16x128xf32>
    %43 = vector.extract_strided_slice %34 {offsets = [0, 1, 0], sizes = [8, 16, 128], strides = [1, 1, 1]} : vector<10x24x128xf32> to vector<8x16x128xf32>
    %c1 = arith.constant 1 : index
    %c0_23 = arith.constant 0 : index
    %c0_24 = arith.constant 0 : index
    %44 = vector.load %arg4[%c1, %c0_23, %c0_24] : memref<9x1x128xf32, #tpu.memory_space<vmem>>, vector<1x1x128xf32>
    %45 = vector.shape_cast %44 : vector<1x1x128xf32> to vector<1x128xf32>
    %46 = vector.shape_cast %45 : vector<1x128xf32> to vector<1x1x128xf32>
    %47 = vector.broadcast %46 : vector<1x1x128xf32> to vector<8x16x128xf32>
    %48 = arith.mulf %43, %47 : vector<8x16x128xf32>
    %49 = arith.addf %42, %48 : vector<8x16x128xf32>
    %50 = vector.extract_strided_slice %34 {offsets = [0, 2, 0], sizes = [8, 16, 128], strides = [1, 1, 1]} : vector<10x24x128xf32> to vector<8x16x128xf32>
    %c2 = arith.constant 2 : index
    %c0_25 = arith.constant 0 : index
    %c0_26 = arith.constant 0 : index
    %51 = vector.load %arg4[%c2, %c0_25, %c0_26] : memref<9x1x128xf32, #tpu.memory_space<vmem>>, vector<1x1x128xf32>
    %52 = vector.shape_cast %51 : vector<1x1x128xf32> to vector<1x128xf32>
    %53 = vector.shape_cast %52 : vector<1x128xf32> to vector<1x1x128xf32>
    %54 = vector.broadcast %53 : vector<1x1x128xf32> to vector<8x16x128xf32>
    %55 = arith.mulf %50, %54 : vector<8x16x128xf32>
    %56 = arith.addf %49, %55 : vector<8x16x128xf32>
    %57 = vector.extract_strided_slice %34 {offsets = [1, 0, 0], sizes = [8, 16, 128], strides = [1, 1, 1]} : vector<10x24x128xf32> to vector<8x16x128xf32>
    %c3 = arith.constant 3 : index
    %c0_27 = arith.constant 0 : index
    %c0_28 = arith.constant 0 : index
    %58 = vector.load %arg4[%c3, %c0_27, %c0_28] : memref<9x1x128xf32, #tpu.memory_space<vmem>>, vector<1x1x128xf32>
    %59 = vector.shape_cast %58 : vector<1x1x128xf32> to vector<1x128xf32>
    %60 = vector.shape_cast %59 : vector<1x128xf32> to vector<1x1x128xf32>
    %61 = vector.broadcast %60 : vector<1x1x128xf32> to vector<8x16x128xf32>
    %62 = arith.mulf %57, %61 : vector<8x16x128xf32>
    %63 = arith.addf %56, %62 : vector<8x16x128xf32>
    %64 = vector.extract_strided_slice %34 {offsets = [1, 1, 0], sizes = [8, 16, 128], strides = [1, 1, 1]} : vector<10x24x128xf32> to vector<8x16x128xf32>
    %c4 = arith.constant 4 : index
    %c0_29 = arith.constant 0 : index
    %c0_30 = arith.constant 0 : index
    %65 = vector.load %arg4[%c4, %c0_29, %c0_30] : memref<9x1x128xf32, #tpu.memory_space<vmem>>, vector<1x1x128xf32>
    %66 = vector.shape_cast %65 : vector<1x1x128xf32> to vector<1x128xf32>
    %67 = vector.shape_cast %66 : vector<1x128xf32> to vector<1x1x128xf32>
    %68 = vector.broadcast %67 : vector<1x1x128xf32> to vector<8x16x128xf32>
    %69 = arith.mulf %64, %68 : vector<8x16x128xf32>
    %70 = arith.addf %63, %69 : vector<8x16x128xf32>
    %71 = vector.extract_strided_slice %34 {offsets = [1, 2, 0], sizes = [8, 16, 128], strides = [1, 1, 1]} : vector<10x24x128xf32> to vector<8x16x128xf32>
    %c5 = arith.constant 5 : index
    %c0_31 = arith.constant 0 : index
    %c0_32 = arith.constant 0 : index
    %72 = vector.load %arg4[%c5, %c0_31, %c0_32] : memref<9x1x128xf32, #tpu.memory_space<vmem>>, vector<1x1x128xf32>
    %73 = vector.shape_cast %72 : vector<1x1x128xf32> to vector<1x128xf32>
    %74 = vector.shape_cast %73 : vector<1x128xf32> to vector<1x1x128xf32>
    %75 = vector.broadcast %74 : vector<1x1x128xf32> to vector<8x16x128xf32>
    %76 = arith.mulf %71, %75 : vector<8x16x128xf32>
    %77 = arith.addf %70, %76 : vector<8x16x128xf32>
    %78 = vector.extract_strided_slice %34 {offsets = [2, 0, 0], sizes = [8, 16, 128], strides = [1, 1, 1]} : vector<10x24x128xf32> to vector<8x16x128xf32>
    %c6 = arith.constant 6 : index
    %c0_33 = arith.constant 0 : index
    %c0_34 = arith.constant 0 : index
    %79 = vector.load %arg4[%c6, %c0_33, %c0_34] : memref<9x1x128xf32, #tpu.memory_space<vmem>>, vector<1x1x128xf32>
    %80 = vector.shape_cast %79 : vector<1x1x128xf32> to vector<1x128xf32>
    %81 = vector.shape_cast %80 : vector<1x128xf32> to vector<1x1x128xf32>
    %82 = vector.broadcast %81 : vector<1x1x128xf32> to vector<8x16x128xf32>
    %83 = arith.mulf %78, %82 : vector<8x16x128xf32>
    %84 = arith.addf %77, %83 : vector<8x16x128xf32>
    %85 = vector.extract_strided_slice %34 {offsets = [2, 1, 0], sizes = [8, 16, 128], strides = [1, 1, 1]} : vector<10x24x128xf32> to vector<8x16x128xf32>
    %c7 = arith.constant 7 : index
    %c0_35 = arith.constant 0 : index
    %c0_36 = arith.constant 0 : index
    %86 = vector.load %arg4[%c7, %c0_35, %c0_36] : memref<9x1x128xf32, #tpu.memory_space<vmem>>, vector<1x1x128xf32>
    %87 = vector.shape_cast %86 : vector<1x1x128xf32> to vector<1x128xf32>
    %88 = vector.shape_cast %87 : vector<1x128xf32> to vector<1x1x128xf32>
    %89 = vector.broadcast %88 : vector<1x1x128xf32> to vector<8x16x128xf32>
    %90 = arith.mulf %85, %89 : vector<8x16x128xf32>
    %91 = arith.addf %84, %90 : vector<8x16x128xf32>
    %92 = vector.extract_strided_slice %34 {offsets = [2, 2, 0], sizes = [8, 16, 128], strides = [1, 1, 1]} : vector<10x24x128xf32> to vector<8x16x128xf32>
    %c8 = arith.constant 8 : index
    %c0_37 = arith.constant 0 : index
    %c0_38 = arith.constant 0 : index
    %93 = vector.load %arg4[%c8, %c0_37, %c0_38] : memref<9x1x128xf32, #tpu.memory_space<vmem>>, vector<1x1x128xf32>
    %94 = vector.shape_cast %93 : vector<1x1x128xf32> to vector<1x128xf32>
    %95 = vector.shape_cast %94 : vector<1x128xf32> to vector<1x1x128xf32>
    %96 = vector.broadcast %95 : vector<1x1x128xf32> to vector<8x16x128xf32>
    %97 = arith.mulf %92, %96 : vector<8x16x128xf32>
    %98 = arith.addf %91, %97 : vector<8x16x128xf32>
    %c0_39 = arith.constant 0 : index
    %c0_40 = arith.constant 0 : index
    %99 = vector.load %arg5[%c0_39, %c0_40] : memref<1x128xf32, #tpu.memory_space<vmem>>, vector<1x128xf32>
    %100 = vector.shape_cast %99 : vector<1x128xf32> to vector<1x1x128xf32>
    %101 = vector.broadcast %100 : vector<1x1x128xf32> to vector<8x16x128xf32>
    %102 = arith.addf %98, %101 : vector<8x16x128xf32>
    %cst_41 = arith.constant 0.000000e+00 : f32
    %cst_42 = arith.constant 6.000000e+00 : f32
    %103 = vector.broadcast %cst_41 : f32 to vector<8x16x128xf32>
    %104 = arith.maximumf %103, %102 : vector<8x16x128xf32>
    %105 = vector.broadcast %cst_42 : f32 to vector<8x16x128xf32>
    %106 = arith.minimumf %105, %104 : vector<8x16x128xf32>
    %107 = vector.shape_cast %106 : vector<8x16x128xf32> to vector<128x128xf32>
    %c0_43 = arith.constant 0 : index
    %c0_44 = arith.constant 0 : index
    %108 = vector.load %arg6[%c0_43, %c0_44] : memref<128x128xf32, #tpu.memory_space<vmem>>, vector<128x128xf32>
    %cst_45 = arith.constant dense<0.000000e+00> : vector<128x128xf32>
    %109 = tpu.matmul %107, %108, %cst_45 {dimension_numbers = #tpu.dot_dimension_numbers<[1], [0], [0], [1], [0, 0, 1, 1], [], []>} : vector<128x128xf32>, vector<128x128xf32>, vector<128x128xf32> -> vector<128x128xf32>
    %c0_46 = arith.constant 0 : index
    %c0_47 = arith.constant 0 : index
    %110 = vector.load %arg7[%c0_46, %c0_47] : memref<1x128xf32, #tpu.memory_space<vmem>>, vector<1x128xf32>
    %111 = vector.broadcast %110 : vector<1x128xf32> to vector<128x128xf32>
    %112 = arith.addf %109, %111 : vector<128x128xf32>
    %113 = vector.extract_strided_slice %26 {offsets = [1, 1, 0], sizes = [8, 16, 128], strides = [1, 1, 1]} : vector<10x24x128xf32> to vector<8x16x128xf32>
    %114 = vector.shape_cast %113 : vector<8x16x128xf32> to vector<128x128xf32>
    %115 = arith.addf %112, %114 : vector<128x128xf32>
    %116 = vector.shape_cast %115 : vector<128x128xf32> to vector<1x128x128xf32>
    %c0_48 = arith.constant 0 : index
    %c0_49 = arith.constant 0 : index
    %c0_50 = arith.constant 0 : index
    %117 = vector.load %arg8[%c0_48, %c0_49, %c0_50] : memref<1x128x128xf32, #tpu.memory_space<vmem>>, vector<1x128x128xf32>
    tpu.vector_store %arg8[%c0_48, %c0_49, %c0_50], %116 {strides = array<i32>} : memref<1x128x128xf32, #tpu.memory_space<vmem>>, vector<1x128x128xf32>,
    return
  }
  func.func @transform_1(%arg0: i32, %arg1: i32) -> (i32, i32) {
    %c0_i32 = arith.constant 0 : i32
    %c0_i32_0 = arith.constant 0 : i32
    %c0_i32_1 = arith.constant 0 : i32
    return %c0_i32, %c0_i32_0 : i32, i32
  }
  func.func @transform_2(%arg0: i32, %arg1: i32) -> (i32, i32, i32) {
    %c0_i32 = arith.constant 0 : i32
    %c0_i32_0 = arith.constant 0 : i32
    %c0_i32_1 = arith.constant 0 : i32
    %c0_i32_2 = arith.constant 0 : i32
    return %c0_i32, %c0_i32_0, %c0_i32_1 : i32, i32, i32
  }
  func.func @transform_3(%arg0: i32, %arg1: i32) -> (i32, i32) {
    %c0_i32 = arith.constant 0 : i32
    %c0_i32_0 = arith.constant 0 : i32
    %c0_i32_1 = arith.constant 0 : i32
    return %c0_i32, %c0_i32_0 : i32, i32
  }
  func.func @transform_4(%arg0: i32, %arg1: i32) -> (i32, i32) {
    %c0_i32 = arith.constant 0 : i32
    %c0_i32_0 = arith.constant 0 : i32
    %c0_i32_1 = arith.constant 0 : i32
    return %c0_i32, %c0_i32_0 : i32, i32
  }
  func.func @transform_5(%arg0: i32, %arg1: i32) -> (i32, i32) {
    %c0_i32 = arith.constant 0 : i32
    %c0_i32_0 = arith.constant 0 : i32
    %c0_i32_1 = arith.constant 0 : i32
    return %c0_i32, %c0_i32_0 : i32, i32
  }
  func.func @transform_6(%arg0: i32, %arg1: i32) -> (i32, i32, i32) {
    %c0_i32 = arith.constant 0 : i32
    %c0_i32_0 = arith.constant 0 : i32
    return %arg0, %arg1, %c0_i32 : i32, i32, i32
  }
}

</mosaic_0001>

<llo_original>
// kernel: tpu_custom_call.1
$region0: #{tpu_custom_call.1}
  #allocation0 [shape = 'u32[]', space=smem, size = 0x4, offset = 0x4, fixed_abs, tag = 'smem constant byte address 0x4 - core index']
  #allocation1 [shape = 'u32[72,128]{1,0:T(1,128)}', space=vmem, size = 0x9000, scoped, tag = 'internal scratch']
  #allocation2 [shape = 'f32[2,10,24,128]{3,2,1,0:T(8,128)}', space=vmem, size = 0x3c000, scoped, tag = 'scratch operand']
  #allocation3 [shape = 's32[2]{0}', space=sflag, size = 0x8, scoped, tag = 'scratch operand']
  #allocation11 [shape = 's32[]', space=sflag, size = 0x4, offset = 0, fixed_abs, tag = 'sflag constant byte address 0x0 - dummy sync flag']
  #allocation12 [shape = 's32[]', space=sflag, size = 0x4, offset = 0, fixed_abs, tag = 'sflag constant byte address 0x0 - dummy sync flag']
  #allocation13 [shape = 'u32[]', space=smem, size = 0x4, offset = 0x44, fixed_abs, tag = 'smem constant byte address 0x44 - assertion arg 0']
  #allocation14 [shape = 'u32[]', space=smem, size = 0x4, offset = 0x48, fixed_abs, tag = 'smem constant byte address 0x48 - assertion arg 1']
  #allocation15 [shape = 's32[]', space=sflag, size = 0x4, offset = 0, fixed_abs, tag = 'sflag constant byte address 0x0 - dummy sync flag']
  #allocation16 [shape = 's32[]', space=sflag, size = 0x4, offset = 0, fixed_abs, tag = 'sflag constant byte address 0x0 - dummy sync flag']
  %s0 = inlined_call_operand.hbm [shape: f32[2,18,24,128], index: 0, kind: input, shape index: {}]
  %s1 = inlined_call_operand.hbm [shape: f32[128,128], index: 1, kind: input, shape index: {}]
  %s2 = inlined_call_operand.hbm [shape: f32[9,1,128], index: 2, kind: input, shape index: {}]
  %s3 = inlined_call_operand.vmem [shape: f32[1,128], index: 3, kind: input, shape index: {}]
  %s4 = inlined_call_operand.hbm [shape: f32[128,128], index: 4, kind: input, shape index: {}]
  %s5 = inlined_call_operand.vmem [shape: f32[1,128], index: 5, kind: input, shape index: {}]
  %s6 = inlined_call_operand.hbm [shape: f32[2,256,128], index: 6, kind: output, shape index: {}]
  %s7 = sld [smem:[#allocation0]]
  $region81: #{tpu_custom_call.1} parent=0
    _
  %s9 = ssub.s32 1, %s7
  %s10 = scalar_select 0, %s9, %s7
  $region1: #{tpu_custom_call.1} parent=0
    #allocation4 [shape = 'u8[65536]{0}', space=vmem, size = 0x10000, scoped, tag = 'input window, operand 1, single buffered']
    #allocation5 [shape = 's32[2]{0}', space=sflag, size = 0x8, scoped, tag = 'scoped memory for tpu_custom_call.1']
    #allocation6 [shape = 's32[2]{0}', space=sflag, size = 0x8, scoped, tag = 'scoped memory for tpu_custom_call.1']
    #allocation7 [shape = 'u8[4608]{0}', space=vmem, size = 0x1400, scoped, tag = 'input window, operand 2, single buffered']
    #allocation8 [shape = 's32[1]{0}', space=sflag, size = 0x4, scoped, tag = 'scoped memory for tpu_custom_call.1']
    #allocation9 [shape = 'u8[65536]{0}', space=vmem, size = 0x10000, scoped, tag = 'input window, operand 4, single buffered']
    #allocation10 [shape = 'u8[131072]{0}', space=vmem, size = 0x20000, scoped, tag = 'output window, operand 0']
    %11 = vsyncpa [#allocation5], 0
    %12 = vsyncpa [#allocation8], 0
    %13 = vsyncpa [#allocation6], 0
    %s14 = scalar_lea.sflag [#allocation6], 1
    %15 = vsyncpa %s14, 0
    loop: start=0, step=1, limit=6
    $region2: #{tpu_custom_call.1} parent=1 // loop_pre_header
      _
    $region3: #{tpu_custom_call.1} parent=1 // loop_header
      %s17 = sphi 0, %s21
      %p18 = scmp.ge.s32.totalorder %s17, 6
      %s24 = sphi 0, %s36
      %s25 = sphi 0, %s32
      %s26 = sphi 0, %s24
      %s27 = sphi 0, %s25
      %s28 = sphi 0, %s26
      %s29 = sphi 0, %s27
      %s37 = sphi 0, %s37
      %s39 = sphi 0, %s37
      %s40 = sphi 0, %s39
      %s54 = sphi 0, %s40
      %s58 = sphi 0, %s58
      %s60 = sphi 0, %s58
      %s61 = sphi 0, %s60
      %s75 = sphi 0, %s61
      %s79 = sphi 0, %s79
      %s81 = sphi 0, %s79
      %s82 = sphi 0, %s81
      %s96 = sphi 0, %s82
      %s100 = sphi 0, %s100
      %s102 = sphi 0, %s100
      %s103 = sphi 0, %s102
      %s117 = sphi 0, %s103
      %s121 = sphi 0, %s121
      %s123 = sphi 0, %s121
      %s124 = sphi 0, %s123
      %s138 = sphi 0, %s124
      %s146 = sphi 0, %s148
      %s149 = sphi 0, %s146
      %s150 = sphi 0, %s149
      %s166 = sphi 0, %s150
    $region4: #{tpu_custom_call.1} parent=1 // loop_header_branch
      %20 = sbr.rel (%p18) target = $region8
    $region5: #{tpu_custom_call.1} parent=1 // loop_body
      %s22 = ssub.s32 %s17, 1
      %s23 = ssub.s32 %s17, 2
      %s30 = sadd.s32 1, %s25
      %p31 = scmp.ge.s32.totalorder %s30, 2
      %s32 = scalar_select %p31, 0, %s30
      %s33 = sadd.s32 1, %s24
      %s34 = scalar_select %p31, %s33, %s24
      %p35 = scmp.ge.s32.totalorder %s34, 2
      %s36 = scalar_select %p35, 0, %s34
      %s38 = sadd.s32 %s37, 1
      %p41 = scmp.eq.s32.totalorder %s17, 3
      %p42 = scmp.ne.s32.totalorder %s37, %s39
      %p43 = scmp.eq.s32.totalorder %s17, 0
      %p44 = por %p42, %p43
      %p45 = scmp.ne.s32.totalorder %s37, %s39
      %p46 = scmp.eq.s32.totalorder %s22, 3
      %p47 = por %p45, %p46
      %p48 = scmp.ne.s32.totalorder %s39, %s40
      %p49 = scmp.eq.s32.totalorder %s22, 0
      %p50 = por %p48, %p49
      %p51 = scmp.ne.s32.totalorder %s39, %s40
      %p52 = scmp.eq.s32.totalorder %s23, 3
      %p53 = por %p51, %p52
      %p55 = scmp.ne.s32.totalorder %s40, %s54
      %p56 = scmp.eq.s32.totalorder %s23, 0
      %p57 = por %p55, %p56
      %s59 = sadd.s32 %s58, 1
      %p62 = scmp.eq.s32.totalorder %s17, 3
      %p63 = scmp.ne.s32.totalorder %s58, %s60
      %p64 = scmp.eq.s32.totalorder %s17, 0
      %p65 = por %p63, %p64
      %p66 = scmp.ne.s32.totalorder %s58, %s60
      %p67 = scmp.eq.s32.totalorder %s22, 3
      %p68 = por %p66, %p67
      %p69 = scmp.ne.s32.totalorder %s60, %s61
      %p70 = scmp.eq.s32.totalorder %s22, 0
      %p71 = por %p69, %p70
      %p72 = scmp.ne.s32.totalorder %s60, %s61
      %p73 = scmp.eq.s32.totalorder %s23, 3
      %p74 = por %p72, %p73
      %p76 = scmp.ne.s32.totalorder %s61, %s75
      %p77 = scmp.eq.s32.totalorder %s23, 0
      %p78 = por %p76, %p77
      %s80 = sadd.s32 %s79, 1
      %p83 = scmp.eq.s32.totalorder %s17, 3
      %p84 = scmp.ne.s32.totalorder %s79, %s81
      %p85 = scmp.eq.s32.totalorder %s17, 0
      %p86 = por %p84, %p85
      %p87 = scmp.ne.s32.totalorder %s79, %s81
      %p88 = scmp.eq.s32.totalorder %s22, 3
      %p89 = por %p87, %p88
      %p90 = scmp.ne.s32.totalorder %s81, %s82
      %p91 = scmp.eq.s32.totalorder %s22, 0
      %p92 = por %p90, %p91
      %p93 = scmp.ne.s32.totalorder %s81, %s82
      %p94 = scmp.eq.s32.totalorder %s23, 3
      %p95 = por %p93, %p94
      %p97 = scmp.ne.s32.totalorder %s82, %s96
      %p98 = scmp.eq.s32.totalorder %s23, 0
      %p99 = por %p97, %p98
      %s101 = sadd.s32 %s100, 1
      %p104 = scmp.eq.s32.totalorder %s17, 3
      %p105 = scmp.ne.s32.totalorder %s100, %s102
      %p106 = scmp.eq.s32.totalorder %s17, 0
      %p107 = por %p105, %p106
      %p108 = scmp.ne.s32.totalorder %s100, %s102
      %p109 = scmp.eq.s32.totalorder %s22, 3
      %p110 = por %p108, %p109
      %p111 = scmp.ne.s32.totalorder %s102, %s103
      %p112 = scmp.eq.s32.totalorder %s22, 0
      %p113 = por %p111, %p112
      %p114 = scmp.ne.s32.totalorder %s102, %s103
      %p115 = scmp.eq.s32.totalorder %s23, 3
      %p116 = por %p114, %p115
      %p118 = scmp.ne.s32.totalorder %s103, %s117
      %p119 = scmp.eq.s32.totalorder %s23, 0
      %p120 = por %p118, %p119
      %s122 = sadd.s32 %s121, 1
      %p125 = scmp.eq.s32.totalorder %s17, 3
      %p126 = scmp.ne.s32.totalorder %s121, %s123
      %p127 = scmp.eq.s32.totalorder %s17, 0
      %p128 = por %p126, %p127
      %p129 = scmp.ne.s32.totalorder %s121, %s123
      %p130 = scmp.eq.s32.totalorder %s22, 3
      %p131 = por %p129, %p130
      %p132 = scmp.ne.s32.totalorder %s123, %s124
      %p133 = scmp.eq.s32.totalorder %s22, 0
      %p134 = por %p132, %p133
      %p135 = scmp.ne.s32.totalorder %s123, %s124
      %p136 = scmp.eq.s32.totalorder %s23, 3
      %p137 = por %p135, %p136
      %p139 = scmp.ne.s32.totalorder %s124, %s138
      %p140 = scmp.eq.s32.totalorder %s23, 0
      %p141 = por %p139, %p140
      %s142 = ssub.s32 %s24, %s36
      %s143 = ssub.s32 %s25, %s32
      %s144 = sor.u32 %s142, %s143
      %p145 = scmp.eq.s32.totalorder %s144, 0
      %s147 = sadd.s32 %s146, 1
      %s148 = scalar_select %p145, %s146, %s147
      %p151 = pneg %p145
      %p152 = scmp.eq.s32.totalorder %s17, 3
      %p153 = por %p151, %p152
      %p154 = scmp.ne.s32.totalorder %s146, %s149
      %p155 = scmp.eq.s32.totalorder %s17, 0
      %p156 = por %p154, %p155
      %p157 = scmp.ne.s32.totalorder %s146, %s149
      %p158 = scmp.eq.s32.totalorder %s22, 3
      %p159 = por %p157, %p158
      %p160 = scmp.ne.s32.totalorder %s149, %s150
      %p161 = scmp.eq.s32.totalorder %s22, 0
      %p162 = por %p160, %p161
      %p163 = scmp.ne.s32.totalorder %s149, %s150
      %p164 = scmp.eq.s32.totalorder %s23, 3
      %p165 = por %p163, %p164
      %p167 = scmp.ne.s32.totalorder %s150, %s166
      %p168 = scmp.eq.s32.totalorder %s23, 0
      %p169 = por %p167, %p168
      %p170 = scmp.le.s32.totalorder 1, %s17
      %p171 = scmp.lt.s32.totalorder %s17, 5
      %p172 = pnand %p170, %p171
      %p173 = pneg %p172
      // Predicated region
      $region9: #{tpu_custom_call.1} parent=5 // pred_check
        _
      $region10: #{tpu_custom_call.1} parent=5 // pred_check_branch
        %175 = sbr.rel (%p172) target = $region12
      $region11: #{tpu_custom_call.1} parent=5 // pred_region
        %s176 = ssub.s32 %s17, 1
        // Predicated region
        $region13: #{tpu_custom_call.1} parent=11 // pred_check
          %p177 = pneg %p50
        $region14: #{tpu_custom_call.1} parent=11 // pred_check_branch
          %179 = sbr.rel (%p177) target = $region16
        $region15: #{tpu_custom_call.1} parent=11 // pred_region
          %181 = vsyncadd [#allocation5], 0
          %s182 = sshll.u32 %s1, 4
          %s183 = int_to_ptr.hbm [resolvable:$true] %s182
          %s184 = sshll.u32 [#allocation4], 4
          %s185 = int_to_ptr.vmem [resolvable:$true] %s184
          %190 = dma.hbm_to_vmem [thread:$0]  %s183, 2048, %s185, [#allocation5], 128, 128, 8
        $region16: #{tpu_custom_call.1} parent=11 // pred_fallthru
          _
        // Predicated region
        $region17: #{tpu_custom_call.1} parent=11 // pred_check
          %p191 = pneg %p71
        $region18: #{tpu_custom_call.1} parent=11 // pred_check_branch
          %193 = sbr.rel (%p191) target = $region20
        $region19: #{tpu_custom_call.1} parent=11 // pred_region
          %195 = vsyncadd [#allocation8], 0
          %s196 = sshll.u32 %s2, 4
          %s197 = int_to_ptr.hbm [resolvable:$true] %s196
          %s198 = sshll.u32 [#allocation7], 4
          %s199 = int_to_ptr.vmem [resolvable:$true] %s198
          %204 = dma.hbm_to_vmem [thread:$0]  %s197, 144, %s199, [#allocation8], 16, 16, 1
        $region20: #{tpu_custom_call.1} parent=11 // pred_fallthru
          _
        // Predicated region
        $region21: #{tpu_custom_call.1} parent=11 // pred_check
          %p205 = pneg %p92
        $region22: #{tpu_custom_call.1} parent=11 // pred_check_branch
          %207 = sbr.rel (%p205) target = $region24
        $region23: #{tpu_custom_call.1} parent=11 // pred_region
          _
        $region24: #{tpu_custom_call.1} parent=11 // pred_fallthru
          _
        // Predicated region
        $region25: #{tpu_custom_call.1} parent=11 // pred_check
          %p208 = pneg %p113
        $region26: #{tpu_custom_call.1} parent=11 // pred_check_branch
          %210 = sbr.rel (%p208) target = $region28
        $region27: #{tpu_custom_call.1} parent=11 // pred_region
          %212 = vsyncadd [#allocation8], 0
          %s213 = sshll.u32 %s4, 4
          %s214 = int_to_ptr.hbm [resolvable:$true] %s213
          %s215 = sshll.u32 [#allocation9], 4
          %s216 = int_to_ptr.vmem [resolvable:$true] %s215
          %221 = dma.hbm_to_vmem [thread:$0]  %s214, 2048, %s216, [#allocation8], 128, 128, 8
        $region28: #{tpu_custom_call.1} parent=11 // pred_fallthru
          _
        // Predicated region
        $region29: #{tpu_custom_call.1} parent=11 // pred_check
          %p222 = pneg %p134
        $region30: #{tpu_custom_call.1} parent=11 // pred_check_branch
          %224 = sbr.rel (%p222) target = $region32
        $region31: #{tpu_custom_call.1} parent=11 // pred_region
          _
        $region32: #{tpu_custom_call.1} parent=11 // pred_fallthru
          _
      $region12: #{tpu_custom_call.1} parent=5 // pred_fallthru
        _
      %p225 = scmp.lt.s32.totalorder %s17, 4
      // Predicated region
      $region33: #{tpu_custom_call.1} parent=5 // pred_check
        %p226 = pneg %p225
      $region34: #{tpu_custom_call.1} parent=5 // pred_check_branch
        %228 = sbr.rel (%p226) target = $region36
      $region35: #{tpu_custom_call.1} parent=5 // pred_region
        _
      $region36: #{tpu_custom_call.1} parent=5 // pred_fallthru
        _
      %p229 = scmp.le.s32.totalorder 1, %s17
      %p230 = scmp.lt.s32.totalorder %s17, 5
      %p231 = pnand %p229, %p230
      %p232 = pneg %p231
      // Predicated region
      $region37: #{tpu_custom_call.1} parent=5 // pred_check
        _
      $region38: #{tpu_custom_call.1} parent=5 // pred_check_branch
        %234 = sbr.rel (%p231) target = $region40
      $region39: #{tpu_custom_call.1} parent=5 // pred_region
        %s235 = ssub.s32 %s17, 1
        // Predicated region
        $region41: #{tpu_custom_call.1} parent=39 // pred_check
          %p236 = pneg %p50
        $region42: #{tpu_custom_call.1} parent=39 // pred_check_branch
          %238 = sbr.rel (%p236) target = $region44
        $region43: #{tpu_custom_call.1} parent=39 // pred_region
          %240 = dma.done [#allocation5], 2048
        $region44: #{tpu_custom_call.1} parent=39 // pred_fallthru
          _
        // Predicated region
        $region45: #{tpu_custom_call.1} parent=39 // pred_check
          %p241 = pneg %p71
        $region46: #{tpu_custom_call.1} parent=39 // pred_check_branch
          %243 = sbr.rel (%p241) target = $region48
        $region47: #{tpu_custom_call.1} parent=39 // pred_region
          %245 = dma.done [#allocation8], 144
        $region48: #{tpu_custom_call.1} parent=39 // pred_fallthru
          _
        // Predicated region
        $region49: #{tpu_custom_call.1} parent=39 // pred_check
          %p246 = pneg %p113
        $region50: #{tpu_custom_call.1} parent=39 // pred_check_branch
          %248 = sbr.rel (%p246) target = $region52
        $region51: #{tpu_custom_call.1} parent=39 // pred_region
          %250 = dma.done [#allocation8], 2048
        $region52: #{tpu_custom_call.1} parent=39 // pred_fallthru
          _
        %p251 = pneg %p50
        %p252 = pneg %p47
        %p253 = pneg %p71
        %p254 = pneg %p68
        %p255 = pneg %p92
        %p256 = pneg %p89
        %p257 = pneg %p113
        %p258 = pneg %p110
        %p259 = pneg %p134
        %p260 = pneg %p131
        %p261 = pneg %p162
        %p262 = pneg %p159
        %s263 = sand.u32 %s149, 1
        %s264 = scalar_lea.sflag [#allocation6], %s263
        %s265 = sand.u32 %s149, 1
        %s266 = smul.addr %s265, 128
        %s267 = scalar_lea.vmem [#allocation10], %s266
        %s268 = smul.u32 16, %s27
        %s269 = smul.u32 %s27, 8
        %p270 = scmp.lt.s32.totalorder %s27, 0
        %s271 = ssub.s32 0, %s27
        %s272 = scalar_select %p270, %s271, %s27
        %s273 = sand.u32 %s272, 1
        %s274 = ssub.s32 0, %s273
        %s275 = scalar_select %p270, %s274, %s273
        %p276 = scmp.ne.s32.totalorder %s275, 0
        %p277 = scmp.lt.s32.totalorder %s275, 0
        %p278 = pnand %p277, %p276
        %p279 = pneg %p278
        %s280 = sadd.s32 %s275, 2
        %s281 = scalar_select %p279, %s280, %s275
        %p282 = scmp.eq.s32.totalorder %s27, 0
        // Predicated region
        $region53: #{tpu_custom_call.1} parent=39 // pred_check
          %p283 = pneg %p282
        $region54: #{tpu_custom_call.1} parent=39 // pred_check_branch
          %285 = sbr.rel (%p283) target = $region56
        $region55: #{tpu_custom_call.1} parent=39 // pred_region
          %s286 = smul.u32 %s269, 24
          %s287 = smul.u32 %s26, 432
          %s288 = sadd.s32 %s286, %s287
          %s289 = scalar_lea.hbm %s0, %s288
          %s290 = smul.u32 %s281, 240
          %s291 = scalar_lea.vmem [#allocation2], %s290
          %s292 = scalar_lea.sflag [#allocation3], %s281
          // Predicated region
          $region57: #{tpu_custom_call.1} parent=55 // pred_check
            _
          $region58: #{tpu_custom_call.1} parent=55 // pred_check_branch
            %294 = sbr.rel target = $region60
          $region59: #{tpu_custom_call.1} parent=55 // pred_region
            %295 = sst [smem:[#allocation13]] [#allocation12]
            %296 = sst [smem:[#allocation14]] [#allocation11]
          $region60: #{tpu_custom_call.1} parent=55 // pred_fallthru
            _
          %298 = shalt.err (0)
          %s300 = sshll.u32 %s289, 4
          %s301 = int_to_ptr.hbm [resolvable:$true] %s300
          %s302 = sshll.u32 %s291, 4
          %s303 = int_to_ptr.vmem [resolvable:$true] %s302
          %305 = dma.hbm_to_vmem [thread:$0]  %s301, 3840, %s303, %s292
        $region56: #{tpu_custom_call.1} parent=39 // pred_fallthru
          _
        %s306 = sadd.s32 %s27, 1
        %p307 = scmp.lt.s32.totalorder %s306, 2
        // Predicated region
        $region61: #{tpu_custom_call.1} parent=39 // pred_check
          %p308 = pneg %p307
        $region62: #{tpu_custom_call.1} parent=39 // pred_check_branch
          %310 = sbr.rel (%p308) target = $region64
        $region63: #{tpu_custom_call.1} parent=39 // pred_region
          %s311 = sadd.s32 %s269, 8
          %s312 = ssub.s32 1, %s281
          %s313 = smul.u32 %s311, 24
          %s314 = smul.u32 %s26, 432
          %s315 = sadd.s32 %s313, %s314
          %s316 = scalar_lea.hbm %s0, %s315
          %s317 = smul.u32 %s312, 240
          %s318 = scalar_lea.vmem [#allocation2], %s317
          %s319 = scalar_lea.sflag [#allocation3], %s312
          // Predicated region
          $region65: #{tpu_custom_call.1} parent=63 // pred_check
            _
          $region66: #{tpu_custom_call.1} parent=63 // pred_check_branch
            %321 = sbr.rel target = $region68
          $region67: #{tpu_custom_call.1} parent=63 // pred_region
            %322 = sst [smem:[#allocation13]] [#allocation16]
            %323 = sst [smem:[#allocation14]] [#allocation15]
          $region68: #{tpu_custom_call.1} parent=63 // pred_fallthru
            _
          %325 = shalt.err (0)
          %s327 = sshll.u32 %s316, 4
          %s328 = int_to_ptr.hbm [resolvable:$true] %s327
          %s329 = sshll.u32 %s318, 4
          %s330 = int_to_ptr.vmem [resolvable:$true] %s329
          %332 = dma.hbm_to_vmem [thread:$0]  %s328, 3840, %s330, %s319
        $region64: #{tpu_custom_call.1} parent=39 // pred_fallthru
          _
        %s333 = smul.u32 %s281, 240
        %s334 = scalar_lea.vmem [#allocation2], %s333
        %s335 = scalar_lea.sflag [#allocation3], %s281
        %s336 = smul.u32 10, 24
        %s337 = smul.u32 %s336, 1
        %s338 = sshll.u32 %s337, 4
        %339 = dma.done %s335, %s338
        %v340 = vld [vmem:[%s334] sm:$0xff]
        %v341 = vld [vmem:[%s334 + $0x8] sm:$0xff]
        %v342 = vld [vmem:[%s334 + $0x10] sm:$0xff]
        %v343 = vld [vmem:[%s334 + $0x18] sm:$0xff]
        %v344 = vld [vmem:[%s334 + $0x20] sm:$0xff]
        %v345 = vld [vmem:[%s334 + $0x28] sm:$0xff]
        %v346 = vld [vmem:[%s334 + $0x30] sm:$0xff]
        %v347 = vld [vmem:[%s334 + $0x38] sm:$0xff]
        %v348 = vld [vmem:[%s334 + $0x40] sm:$0xff]
        %v349 = vld [vmem:[%s334 + $0x48] sm:$0xff]
        %v350 = vld [vmem:[%s334 + $0x50] sm:$0xff]
        %v351 = vld [vmem:[%s334 + $0x58] sm:$0xff]
        %v352 = vld [vmem:[%s334 + $0x60] sm:$0xff]
        %v353 = vld [vmem:[%s334 + $0x68] sm:$0xff]
        %v354 = vld [vmem:[%s334 + $0x70] sm:$0xff]
        %v355 = vld [vmem:[%s334 + $0x78] sm:$0xff]
        %v356 = vld [vmem:[%s334 + $0x80] sm:$0xff]
        %v357 = vld [vmem:[%s334 + $0x88] sm:$0xff]
        %v358 = vld [vmem:[%s334 + $0x90] sm:$0xff]
        %v359 = vld [vmem:[%s334 + $0x98] sm:$0xff]
        %v360 = vld [vmem:[%s334 + $0xa0] sm:$0xff]
        %v361 = vld [vmem:[%s334 + $0xa8] sm:$0xff]
        %v362 = vld [vmem:[%s334 + $0xb0] sm:$0xff]
        %v363 = vld [vmem:[%s334 + $0xb8] sm:$0xff]
        %v364 = vld [vmem:[%s334 + $0xc0] sm:$0xff]
        %v365 = vld [vmem:[%s334 + $0xc8] sm:$0xff]
        %v366 = vld [vmem:[%s334 + $0xd0] sm:$0xff]
        %v367 = vld [vmem:[%s334 + $0xd8] sm:$0xff]
        %v368 = vld [vmem:[%s334 + $0xe0] sm:$0xff]
        %v369 = vld [vmem:[%s334 + $0xe8] sm:$0xff]
        %v370 = vld [vmem:[#allocation4] sm:$0xff]
        %v371 = vld [vmem:[#allocation4 + $0x8] sm:$0xff]
        %v372 = vld [vmem:[#allocation4 + $0x10] sm:$0xff]
        %v373 = vld [vmem:[#allocation4 + $0x18] sm:$0xff]
        %v374 = vld [vmem:[#allocation4 + $0x20] sm:$0xff]
        %v375 = vld [vmem:[#allocation4 + $0x28] sm:$0xff]
        %v376 = vld [vmem:[#allocation4 + $0x30] sm:$0xff]
        %v377 = vld [vmem:[#allocation4 + $0x38] sm:$0xff]
        %v378 = vld [vmem:[#allocation4 + $0x40] sm:$0xff]
        %v379 = vld [vmem:[#allocation4 + $0x48] sm:$0xff]
        %v380 = vld [vmem:[#allocation4 + $0x50] sm:$0xff]
        %v381 = vld [vmem:[#allocation4 + $0x58] sm:$0xff]
        %v382 = vld [vmem:[#allocation4 + $0x60] sm:$0xff]
        %v383 = vld [vmem:[#allocation4 + $0x68] sm:$0xff]
        %v384 = vld [vmem:[#allocation4 + $0x70] sm:$0xff]
        %v385 = vld [vmem:[#allocation4 + $0x78] sm:$0xff]
        %386 = vmatpush.msra.mxu0 %v385
        %387 = vmatpush.msra.mxu0 %v384
        %388 = vmatpush.msra.mxu0 %v383
        %389 = vmatpush.msra.mxu0 %v382
        %390 = vmatpush.msra.mxu0 %v381
        %391 = vmatpush.msra.mxu0 %v380
        %392 = vmatpush.msra.mxu0 %v379
        %393 = vmatpush.msra.mxu0 %v378
        %394 = vmatpush.msra.mxu0 %v377
        %395 = vmatpush.msra.mxu0 %v376
        %396 = vmatpush.msra.mxu0 %v375
        %397 = vmatpush.msra.mxu0 %v374
        %398 = vmatpush.msra.mxu0 %v373
        %399 = vmatpush.msra.mxu0 %v372
        %400 = vmatpush.msra.mxu0 %v371
        %401 = vmatpush.msra.mxu0 %v370
        %402 = vmatmul.f32.gmra.mxu0 %v340
        %v403 = vpop.f32.mrf.mxu0
        %v404 = vadd.f32 0.0, %v403
        %405 = vmatmul.f32.gmra.mxu0 %v341
        %v406 = vpop.f32.mrf.mxu0
        %v407 = vadd.f32 0.0, %v406
        %408 = vmatmul.f32.gmra.mxu0 %v342
        %v409 = vpop.f32.mrf.mxu0
        %v410 = vadd.f32 0.0, %v409
        %411 = vmatmul.f32.gmra.mxu0 %v343
        %v412 = vpop.f32.mrf.mxu0
        %v413 = vadd.f32 0.0, %v412
        %414 = vmatmul.f32.gmra.mxu0 %v344
        %v415 = vpop.f32.mrf.mxu0
        %v416 = vadd.f32 0.0, %v415
        %417 = vmatmul.f32.gmra.mxu0 %v345
        %v418 = vpop.f32.mrf.mxu0
        %v419 = vadd.f32 0.0, %v418
        %420 = vmatmul.f32.gmra.mxu0 %v346
        %v421 = vpop.f32.mrf.mxu0
        %v422 = vadd.f32 0.0, %v421
        %423 = vmatmul.f32.gmra.mxu0 %v347
        %v424 = vpop.f32.mrf.mxu0
        %v425 = vadd.f32 0.0, %v424
        %426 = vmatmul.f32.gmra.mxu0 %v348
        %v427 = vpop.f32.mrf.mxu0
        %v428 = vadd.f32 0.0, %v427
        %429 = vmatmul.f32.gmra.mxu0 %v349
        %v430 = vpop.f32.mrf.mxu0
        %v431 = vadd.f32 0.0, %v430
        %432 = vmatmul.f32.gmra.mxu0 %v350
        %v433 = vpop.f32.mrf.mxu0
        %v434 = vadd.f32 0.0, %v433
        %435 = vmatmul.f32.gmra.mxu0 %v351
        %v436 = vpop.f32.mrf.mxu0
        %v437 = vadd.f32 0.0, %v436
        %438 = vmatmul.f32.gmra.mxu0 %v352
        %v439 = vpop.f32.mrf.mxu0
        %v440 = vadd.f32 0.0, %v439
        %441 = vmatmul.f32.gmra.mxu0 %v353
        %v442 = vpop.f32.mrf.mxu0
        %v443 = vadd.f32 0.0, %v442
        %444 = vmatmul.f32.gmra.mxu0 %v354
        %v445 = vpop.f32.mrf.mxu0
        %v446 = vadd.f32 0.0, %v445
        %447 = vmatmul.f32.gmra.mxu0 %v355
        %v448 = vpop.f32.mrf.mxu0
        %v449 = vadd.f32 0.0, %v448
        %450 = vmatmul.f32.gmra.mxu0 %v356
        %v451 = vpop.f32.mrf.mxu0
        %v452 = vadd.f32 0.0, %v451
        %453 = vmatmul.f32.gmra.mxu0 %v357
        %v454 = vpop.f32.mrf.mxu0
        %v455 = vadd.f32 0.0, %v454
        %456 = vmatmul.f32.gmra.mxu0 %v358
        %v457 = vpop.f32.mrf.mxu0
        %v458 = vadd.f32 0.0, %v457
        %459 = vmatmul.f32.gmra.mxu0 %v359
        %v460 = vpop.f32.mrf.mxu0
        %v461 = vadd.f32 0.0, %v460
        %462 = vmatmul.f32.gmra.mxu0 %v360
        %v463 = vpop.f32.mrf.mxu0
        %v464 = vadd.f32 0.0, %v463
        %465 = vmatmul.f32.gmra.mxu0 %v361
        %v466 = vpop.f32.mrf.mxu0
        %v467 = vadd.f32 0.0, %v466
        %468 = vmatmul.f32.gmra.mxu0 %v362
        %v469 = vpop.f32.mrf.mxu0
        %v470 = vadd.f32 0.0, %v469
        %471 = vmatmul.f32.gmra.mxu0 %v363
        %v472 = vpop.f32.mrf.mxu0
        %v473 = vadd.f32 0.0, %v472
        %474 = vmatmul.f32.gmra.mxu0 %v364
        %v475 = vpop.f32.mrf.mxu0
        %v476 = vadd.f32 0.0, %v475
        %477 = vmatmul.f32.gmra.mxu0 %v365
        %v478 = vpop.f32.mrf.mxu0
        %v479 = vadd.f32 0.0, %v478
        %480 = vmatmul.f32.gmra.mxu0 %v366
        %v481 = vpop.f32.mrf.mxu0
        %v482 = vadd.f32 0.0, %v481
        %483 = vmatmul.f32.gmra.mxu0 %v367
        %v484 = vpop.f32.mrf.mxu0
        %v485 = vadd.f32 0.0, %v484
        %486 = vmatmul.f32.gmra.mxu0 %v368
        %v487 = vpop.f32.mrf.mxu0
        %v488 = vadd.f32 0.0, %v487
        %489 = vmatmul.f32.gmra.mxu0 %v369
        %v490 = vpop.f32.mrf.mxu0
        %v491 = vadd.f32 0.0, %v490
        %492 = vdwg.mxu0
        %v493 = vmax.f32 %v404, 0.0
        %v494 = vmax.f32 %v407, 0.0
        %v495 = vmax.f32 %v410, 0.0
        %v496 = vmax.f32 %v413, 0.0
        %v497 = vmax.f32 %v416, 0.0
        %v498 = vmax.f32 %v419, 0.0
        %v499 = vmax.f32 %v422, 0.0
        %v500 = vmax.f32 %v425, 0.0
        %v501 = vmax.f32 %v428, 0.0
        %v502 = vmax.f32 %v431, 0.0
        %v503 = vmax.f32 %v434, 0.0
        %v504 = vmax.f32 %v437, 0.0
        %v505 = vmax.f32 %v440, 0.0
        %v506 = vmax.f32 %v443, 0.0
        %v507 = vmax.f32 %v446, 0.0
        %v508 = vmax.f32 %v449, 0.0
        %v509 = vmax.f32 %v452, 0.0
        %v510 = vmax.f32 %v455, 0.0
        %v511 = vmax.f32 %v458, 0.0
        %v512 = vmax.f32 %v461, 0.0
        %v513 = vmax.f32 %v464, 0.0
        %v514 = vmax.f32 %v467, 0.0
        %v515 = vmax.f32 %v470, 0.0
        %v516 = vmax.f32 %v473, 0.0
        %v517 = vmax.f32 %v476, 0.0
        %v518 = vmax.f32 %v479, 0.0
        %v519 = vmax.f32 %v482, 0.0
        %v520 = vmax.f32 %v485, 0.0
        %v521 = vmax.f32 %v488, 0.0
        %v522 = vmax.f32 %v491, 0.0
        %v523 = vmin.f32 %v493, 6.0
        %v524 = vmin.f32 %v494, 6.0
        %v525 = vmin.f32 %v495, 6.0
        %v526 = vmin.f32 %v496, 6.0
        %v527 = vmin.f32 %v497, 6.0
        %v528 = vmin.f32 %v498, 6.0
        %v529 = vmin.f32 %v499, 6.0
        %v530 = vmin.f32 %v500, 6.0
        %v531 = vmin.f32 %v501, 6.0
        %v532 = vmin.f32 %v502, 6.0
        %v533 = vmin.f32 %v503, 6.0
        %v534 = vmin.f32 %v504, 6.0
        %v535 = vmin.f32 %v505, 6.0
        %v536 = vmin.f32 %v506, 6.0
        %v537 = vmin.f32 %v507, 6.0
        %v538 = vmin.f32 %v508, 6.0
        %v539 = vmin.f32 %v509, 6.0
        %v540 = vmin.f32 %v510, 6.0
        %v541 = vmin.f32 %v511, 6.0
        %v542 = vmin.f32 %v512, 6.0
        %v543 = vmin.f32 %v513, 6.0
        %v544 = vmin.f32 %v514, 6.0
        %v545 = vmin.f32 %v515, 6.0
        %v546 = vmin.f32 %v516, 6.0
        %v547 = vmin.f32 %v517, 6.0
        %v548 = vmin.f32 %v518, 6.0
        %v549 = vmin.f32 %v519, 6.0
        %v550 = vmin.f32 %v520, 6.0
        %v551 = vmin.f32 %v521, 6.0
        %v552 = vmin.f32 %v522, 6.0
        %v553 = vld [vmem:[#allocation7] sm:$0x1]
        %v555 = vperm.slane %v553, 0
        %v557 = vmul.f32 %v523, %v555
        %v558 = vmul.f32 %v524, %v555
        %v559 = vmul.f32 %v526, %v555
        %v560 = vmul.f32 %v527, %v555
        %v561 = vmul.f32 %v529, %v555
        %v562 = vmul.f32 %v530, %v555
        %v563 = vmul.f32 %v532, %v555
        %v564 = vmul.f32 %v533, %v555
        %v565 = vmul.f32 %v535, %v555
        %v566 = vmul.f32 %v536, %v555
        %v567 = vmul.f32 %v538, %v555
        %v568 = vmul.f32 %v539, %v555
        %v569 = vmul.f32 %v541, %v555
        %v570 = vmul.f32 %v542, %v555
        %v571 = vmul.f32 %v544, %v555
        %v572 = vmul.f32 %v545, %v555
        %v573 = vadd.f32 %v557, 0.0
        %v574 = vadd.f32 %v558, 0.0
        %v575 = vadd.f32 %v559, 0.0
        %v576 = vadd.f32 %v560, 0.0
        %v577 = vadd.f32 %v561, 0.0
        %v578 = vadd.f32 %v562, 0.0
        %v579 = vadd.f32 %v563, 0.0
        %v580 = vadd.f32 %v564, 0.0
        %v581 = vadd.f32 %v565, 0.0
        %v582 = vadd.f32 %v566, 0.0
        %v583 = vadd.f32 %v567, 0.0
        %v584 = vadd.f32 %v568, 0.0
        %v585 = vadd.f32 %v569, 0.0
        %v586 = vadd.f32 %v570, 0.0
        %v587 = vadd.f32 %v571, 0.0
        %v588 = vadd.f32 %v572, 0.0
        %s589 = scalar_lea.vmem [#allocation7], 1
        %v590 = vld [vmem:[%s589] sm:$0x1]
        %v592 = vperm.slane %v590, 0
        %v594 = vmul.f32 %v523, %v592
        %v595 = vmul.f32 %v524, %v592
        %v596 = vmul.f32 %v525, %v592
        %v597 = vmul.f32 %v526, %v592
        %v598 = vmul.f32 %v527, %v592
        %v599 = vmul.f32 %v528, %v592
        %v600 = vmul.f32 %v529, %v592
        %v601 = vmul.f32 %v530, %v592
        %v602 = vmul.f32 %v531, %v592
        %v603 = vmul.f32 %v532, %v592
        %v604 = vmul.f32 %v533, %v592
        %v605 = vmul.f32 %v534, %v592
        %v606 = vmul.f32 %v535, %v592
        %v607 = vmul.f32 %v536, %v592
        %v608 = vmul.f32 %v537, %v592
        %v609 = vmul.f32 %v538, %v592
        %v610 = vmul.f32 %v539, %v592
        %v611 = vmul.f32 %v540, %v592
        %v612 = vmul.f32 %v541, %v592
        %v613 = vmul.f32 %v542, %v592
        %v614 = vmul.f32 %v543, %v592
        %v615 = vmul.f32 %v544, %v592
        %v616 = vmul.f32 %v545, %v592
        %v617 = vmul.f32 %v546, %v592
        %vm642 = vcmask 1046528
        %v643 = vrot.slane %v594, 1
        %v644 = vrot.slane %v595, 1
        %v645 = vsel %vm642, %v643, %v644
        %v646 = vrot.slane %v596, 1
        %v647 = vsel %vm642, %v644, %v646
        %v648 = vrot.slane %v597, 1
        %v649 = vrot.slane %v598, 1
        %v650 = vsel %vm642, %v648, %v649
        %v651 = vrot.slane %v599, 1
        %v652 = vsel %vm642, %v649, %v651
        %v653 = vrot.slane %v600, 1
        %v654 = vrot.slane %v601, 1
        %v655 = vsel %vm642, %v653, %v654
        %v656 = vrot.slane %v602, 1
        %v657 = vsel %vm642, %v654, %v656
        %v658 = vrot.slane %v603, 1
        %v659 = vrot.slane %v604, 1
        %v660 = vsel %vm642, %v658, %v659
        %v661 = vrot.slane %v605, 1
        %v662 = vsel %vm642, %v659, %v661
        %v663 = vrot.slane %v606, 1
        %v664 = vrot.slane %v607, 1
        %v665 = vsel %vm642, %v663, %v664
        %v666 = vrot.slane %v608, 1
        %v667 = vsel %vm642, %v664, %v666
        %v668 = vrot.slane %v609, 1
        %v669 = vrot.slane %v610, 1
        %v670 = vsel %vm642, %v668, %v669
        %v671 = vrot.slane %v611, 1
        %v672 = vsel %vm642, %v669, %v671
        %v673 = vrot.slane %v612, 1
        %v674 = vrot.slane %v613, 1
        %v675 = vsel %vm642, %v673, %v674
        %v676 = vrot.slane %v614, 1
        %v677 = vsel %vm642, %v674, %v676
        %v678 = vrot.slane %v615, 1
        %v679 = vrot.slane %v616, 1
        %v680 = vsel %vm642, %v678, %v679
        %v681 = vrot.slane %v617, 1
        %v682 = vsel %vm642, %v679, %v681
        %v699 = vadd.f32 %v573, %v645
        %v700 = vadd.f32 %v574, %v647
        %v701 = vadd.f32 %v575, %v650
        %v702 = vadd.f32 %v576, %v652
        %v703 = vadd.f32 %v577, %v655
        %v704 = vadd.f32 %v578, %v657
        %v705 = vadd.f32 %v579, %v660
        %v706 = vadd.f32 %v580, %v662
        %v707 = vadd.f32 %v581, %v665
        %v708 = vadd.f32 %v582, %v667
        %v709 = vadd.f32 %v583, %v670
        %v710 = vadd.f32 %v584, %v672
        %v711 = vadd.f32 %v585, %v675
        %v712 = vadd.f32 %v586, %v677
        %v713 = vadd.f32 %v587, %v680
        %v714 = vadd.f32 %v588, %v682
        %s715 = scalar_lea.vmem [#allocation7], 2
        %v716 = vld [vmem:[%s715] sm:$0x1]
        %v718 = vperm.slane %v716, 0
        %v720 = vmul.f32 %v523, %v718
        %v721 = vmul.f32 %v524, %v718
        %v722 = vmul.f32 %v525, %v718
        %v723 = vmul.f32 %v526, %v718
        %v724 = vmul.f32 %v527, %v718
        %v725 = vmul.f32 %v528, %v718
        %v726 = vmul.f32 %v529, %v718
        %v727 = vmul.f32 %v530, %v718
        %v728 = vmul.f32 %v531, %v718
        %v729 = vmul.f32 %v532, %v718
        %v730 = vmul.f32 %v533, %v718
        %v731 = vmul.f32 %v534, %v718
        %v732 = vmul.f32 %v535, %v718
        %v733 = vmul.f32 %v536, %v718
        %v734 = vmul.f32 %v537, %v718
        %v735 = vmul.f32 %v538, %v718
        %v736 = vmul.f32 %v539, %v718
        %v737 = vmul.f32 %v540, %v718
        %v738 = vmul.f32 %v541, %v718
        %v739 = vmul.f32 %v542, %v718
        %v740 = vmul.f32 %v543, %v718
        %v741 = vmul.f32 %v544, %v718
        %v742 = vmul.f32 %v545, %v718
        %v743 = vmul.f32 %v546, %v718
        %vm768 = vcmask 1045504
        %v769 = vrot.slane %v720, 2
        %v770 = vrot.slane %v721, 2
        %v771 = vsel %vm768, %v769, %v770
        %v772 = vrot.slane %v722, 2
        %v773 = vsel %vm768, %v770, %v772
        %v774 = vrot.slane %v723, 2
        %v775 = vrot.slane %v724, 2
        %v776 = vsel %vm768, %v774, %v775
        %v777 = vrot.slane %v725, 2
        %v778 = vsel %vm768, %v775, %v777
        %v779 = vrot.slane %v726, 2
        %v780 = vrot.slane %v727, 2
        %v781 = vsel %vm768, %v779, %v780
        %v782 = vrot.slane %v728, 2
        %v783 = vsel %vm768, %v780, %v782
        %v784 = vrot.slane %v729, 2
        %v785 = vrot.slane %v730, 2
        %v786 = vsel %vm768, %v784, %v785
        %v787 = vrot.slane %v731, 2
        %v788 = vsel %vm768, %v785, %v787
        %v789 = vrot.slane %v732, 2
        %v790 = vrot.slane %v733, 2
        %v791 = vsel %vm768, %v789, %v790
        %v792 = vrot.slane %v734, 2
        %v793 = vsel %vm768, %v790, %v792
        %v794 = vrot.slane %v735, 2
        %v795 = vrot.slane %v736, 2
        %v796 = vsel %vm768, %v794, %v795
        %v797 = vrot.slane %v737, 2
        %v798 = vsel %vm768, %v795, %v797
        %v799 = vrot.slane %v738, 2
        %v800 = vrot.slane %v739, 2
        %v801 = vsel %vm768, %v799, %v800
        %v802 = vrot.slane %v740, 2
        %v803 = vsel %vm768, %v800, %v802
        %v804 = vrot.slane %v741, 2
        %v805 = vrot.slane %v742, 2
        %v806 = vsel %vm768, %v804, %v805
        %v807 = vrot.slane %v743, 2
        %v808 = vsel %vm768, %v805, %v807
        %v825 = vadd.f32 %v699, %v771
        %v826 = vadd.f32 %v700, %v773
        %v827 = vadd.f32 %v701, %v776
        %v828 = vadd.f32 %v702, %v778
        %v829 = vadd.f32 %v703, %v781
        %v830 = vadd.f32 %v704, %v783
        %v831 = vadd.f32 %v705, %v786
        %v832 = vadd.f32 %v706, %v788
        %v833 = vadd.f32 %v707, %v791
        %v834 = vadd.f32 %v708, %v793
        %v835 = vadd.f32 %v709, %v796
        %v836 = vadd.f32 %v710, %v798
        %v837 = vadd.f32 %v711, %v801
        %v838 = vadd.f32 %v712, %v803
        %v839 = vadd.f32 %v713, %v806
        %v840 = vadd.f32 %v714, %v808
        %s841 = scalar_lea.vmem [#allocation7], 3
        %v842 = vld [vmem:[%s841] sm:$0x1]
        %v844 = vperm.slane %v842, 0
        %v846 = vmul.f32 %v526, %v844
        %v847 = vmul.f32 %v527, %v844
        %v848 = vmul.f32 %v529, %v844
        %v849 = vmul.f32 %v530, %v844
        %v850 = vmul.f32 %v532, %v844
        %v851 = vmul.f32 %v533, %v844
        %v852 = vmul.f32 %v535, %v844
        %v853 = vmul.f32 %v536, %v844
        %v854 = vmul.f32 %v538, %v844
        %v855 = vmul.f32 %v539, %v844
        %v856 = vmul.f32 %v541, %v844
        %v857 = vmul.f32 %v542, %v844
        %v858 = vmul.f32 %v544, %v844
        %v859 = vmul.f32 %v545, %v844
        %v860 = vmul.f32 %v547, %v844
        %v861 = vmul.f32 %v548, %v844
        %v862 = vadd.f32 %v825, %v846
        %v863 = vadd.f32 %v826, %v847
        %v864 = vadd.f32 %v827, %v848
        %v865 = vadd.f32 %v828, %v849
        %v866 = vadd.f32 %v829, %v850
        %v867 = vadd.f32 %v830, %v851
        %v868 = vadd.f32 %v831, %v852
        %v869 = vadd.f32 %v832, %v853
        %v870 = vadd.f32 %v833, %v854
        %v871 = vadd.f32 %v834, %v855
        %v872 = vadd.f32 %v835, %v856
        %v873 = vadd.f32 %v836, %v857
        %v874 = vadd.f32 %v837, %v858
        %v875 = vadd.f32 %v838, %v859
        %v876 = vadd.f32 %v839, %v860
        %v877 = vadd.f32 %v840, %v861
        %s878 = scalar_lea.vmem [#allocation7], 4
        %v879 = vld [vmem:[%s878] sm:$0x1]
        %v881 = vperm.slane %v879, 0
        %v883 = vmul.f32 %v526, %v881
        %v884 = vmul.f32 %v527, %v881
        %v885 = vmul.f32 %v528, %v881
        %v886 = vmul.f32 %v529, %v881
        %v887 = vmul.f32 %v530, %v881
        %v888 = vmul.f32 %v531, %v881
        %v889 = vmul.f32 %v532, %v881
        %v890 = vmul.f32 %v533, %v881
        %v891 = vmul.f32 %v534, %v881
        %v892 = vmul.f32 %v535, %v881
        %v893 = vmul.f32 %v536, %v881
        %v894 = vmul.f32 %v537, %v881
        %v895 = vmul.f32 %v538, %v881
        %v896 = vmul.f32 %v539, %v881
        %v897 = vmul.f32 %v540, %v881
        %v898 = vmul.f32 %v541, %v881
        %v899 = vmul.f32 %v542, %v881
        %v900 = vmul.f32 %v543, %v881
        %v901 = vmul.f32 %v544, %v881
        %v902 = vmul.f32 %v545, %v881
        %v903 = vmul.f32 %v546, %v881
        %v904 = vmul.f32 %v547, %v881
        %v905 = vmul.f32 %v548, %v881
        %v906 = vmul.f32 %v549, %v881
        %v931 = vrot.slane %v883, 1
        %v932 = vrot.slane %v884, 1
        %v933 = vsel %vm642, %v931, %v932
        %v934 = vrot.slane %v885, 1
        %v935 = vsel %vm642, %v932, %v934
        %v936 = vrot.slane %v886, 1
        %v937 = vrot.slane %v887, 1
        %v938 = vsel %vm642, %v936, %v937
        %v939 = vrot.slane %v888, 1
        %v940 = vsel %vm642, %v937, %v939
        %v941 = vrot.slane %v889, 1
        %v942 = vrot.slane %v890, 1
        %v943 = vsel %vm642, %v941, %v942
        %v944 = vrot.slane %v891, 1
        %v945 = vsel %vm642, %v942, %v944
        %v946 = vrot.slane %v892, 1
        %v947 = vrot.slane %v893, 1
        %v948 = vsel %vm642, %v946, %v947
        %v949 = vrot.slane %v894, 1
        %v950 = vsel %vm642, %v947, %v949
        %v951 = vrot.slane %v895, 1
        %v952 = vrot.slane %v896, 1
        %v953 = vsel %vm642, %v951, %v952
        %v954 = vrot.slane %v897, 1
        %v955 = vsel %vm642, %v952, %v954
        %v956 = vrot.slane %v898, 1
        %v957 = vrot.slane %v899, 1
        %v958 = vsel %vm642, %v956, %v957
        %v959 = vrot.slane %v900, 1
        %v960 = vsel %vm642, %v957, %v959
        %v961 = vrot.slane %v901, 1
        %v962 = vrot.slane %v902, 1
        %v963 = vsel %vm642, %v961, %v962
        %v964 = vrot.slane %v903, 1
        %v965 = vsel %vm642, %v962, %v964
        %v966 = vrot.slane %v904, 1
        %v967 = vrot.slane %v905, 1
        %v968 = vsel %vm642, %v966, %v967
        %v969 = vrot.slane %v906, 1
        %v970 = vsel %vm642, %v967, %v969
        %v987 = vadd.f32 %v862, %v933
        %v988 = vadd.f32 %v863, %v935
        %v989 = vadd.f32 %v864, %v938
        %v990 = vadd.f32 %v865, %v940
        %v991 = vadd.f32 %v866, %v943
        %v992 = vadd.f32 %v867, %v945
        %v993 = vadd.f32 %v868, %v948
        %v994 = vadd.f32 %v869, %v950
        %v995 = vadd.f32 %v870, %v953
        %v996 = vadd.f32 %v871, %v955
        %v997 = vadd.f32 %v872, %v958
        %v998 = vadd.f32 %v873, %v960
        %v999 = vadd.f32 %v874, %v963
        %v1000 = vadd.f32 %v875, %v965
        %v1001 = vadd.f32 %v876, %v968
        %v1002 = vadd.f32 %v877, %v970
        %s1003 = scalar_lea.vmem [#allocation7], 5
        %v1004 = vld [vmem:[%s1003] sm:$0x1]
        %v1006 = vperm.slane %v1004, 0
        %v1008 = vmul.f32 %v526, %v1006
        %v1009 = vmul.f32 %v527, %v1006
        %v1010 = vmul.f32 %v528, %v1006
        %v1011 = vmul.f32 %v529, %v1006
        %v1012 = vmul.f32 %v530, %v1006
        %v1013 = vmul.f32 %v531, %v1006
        %v1014 = vmul.f32 %v532, %v1006
        %v1015 = vmul.f32 %v533, %v1006
        %v1016 = vmul.f32 %v534, %v1006
        %v1017 = vmul.f32 %v535, %v1006
        %v1018 = vmul.f32 %v536, %v1006
        %v1019 = vmul.f32 %v537, %v1006
        %v1020 = vmul.f32 %v538, %v1006
        %v1021 = vmul.f32 %v539, %v1006
        %v1022 = vmul.f32 %v540, %v1006
        %v1023 = vmul.f32 %v541, %v1006
        %v1024 = vmul.f32 %v542, %v1006
        %v1025 = vmul.f32 %v543, %v1006
        %v1026 = vmul.f32 %v544, %v1006
        %v1027 = vmul.f32 %v545, %v1006
        %v1028 = vmul.f32 %v546, %v1006
        %v1029 = vmul.f32 %v547, %v1006
        %v1030 = vmul.f32 %v548, %v1006
        %v1031 = vmul.f32 %v549, %v1006
        %v1056 = vrot.slane %v1008, 2
        %v1057 = vrot.slane %v1009, 2
        %v1058 = vsel %vm768, %v1056, %v1057
        %v1059 = vrot.slane %v1010, 2
        %v1060 = vsel %vm768, %v1057, %v1059
        %v1061 = vrot.slane %v1011, 2
        %v1062 = vrot.slane %v1012, 2
        %v1063 = vsel %vm768, %v1061, %v1062
        %v1064 = vrot.slane %v1013, 2
        %v1065 = vsel %vm768, %v1062, %v1064
        %v1066 = vrot.slane %v1014, 2
        %v1067 = vrot.slane %v1015, 2
        %v1068 = vsel %vm768, %v1066, %v1067
        %v1069 = vrot.slane %v1016, 2
        %v1070 = vsel %vm768, %v1067, %v1069
        %v1071 = vrot.slane %v1017, 2
        %v1072 = vrot.slane %v1018, 2
        %v1073 = vsel %vm768, %v1071, %v1072
        %v1074 = vrot.slane %v1019, 2
        %v1075 = vsel %vm768, %v1072, %v1074
        %v1076 = vrot.slane %v1020, 2
        %v1077 = vrot.slane %v1021, 2
        %v1078 = vsel %vm768, %v1076, %v1077
        %v1079 = vrot.slane %v1022, 2
        %v1080 = vsel %vm768, %v1077, %v1079
        %v1081 = vrot.slane %v1023, 2
        %v1082 = vrot.slane %v1024, 2
        %v1083 = vsel %vm768, %v1081, %v1082
        %v1084 = vrot.slane %v1025, 2
        %v1085 = vsel %vm768, %v1082, %v1084
        %v1086 = vrot.slane %v1026, 2
        %v1087 = vrot.slane %v1027, 2
        %v1088 = vsel %vm768, %v1086, %v1087
        %v1089 = vrot.slane %v1028, 2
        %v1090 = vsel %vm768, %v1087, %v1089
        %v1091 = vrot.slane %v1029, 2
        %v1092 = vrot.slane %v1030, 2
        %v1093 = vsel %vm768, %v1091, %v1092
        %v1094 = vrot.slane %v1031, 2
        %v1095 = vsel %vm768, %v1092, %v1094
        %v1112 = vadd.f32 %v987, %v1058
        %v1113 = vadd.f32 %v988, %v1060
        %v1114 = vadd.f32 %v989, %v1063
        %v1115 = vadd.f32 %v990, %v1065
        %v1116 = vadd.f32 %v991, %v1068
        %v1117 = vadd.f32 %v992, %v1070
        %v1118 = vadd.f32 %v993, %v1073
        %v1119 = vadd.f32 %v994, %v1075
        %v1120 = vadd.f32 %v995, %v1078
        %v1121 = vadd.f32 %v996, %v1080
        %v1122 = vadd.f32 %v997, %v1083
        %v1123 = vadd.f32 %v998, %v1085
        %v1124 = vadd.f32 %v999, %v1088
        %v1125 = vadd.f32 %v1000, %v1090
        %v1126 = vadd.f32 %v1001, %v1093
        %v1127 = vadd.f32 %v1002, %v1095
        %s1128 = scalar_lea.vmem [#allocation7], 6
        %v1129 = vld [vmem:[%s1128] sm:$0x1]
        %v1131 = vperm.slane %v1129, 0
        %v1133 = vmul.f32 %v529, %v1131
        %v1134 = vmul.f32 %v530, %v1131
        %v1135 = vmul.f32 %v532, %v1131
        %v1136 = vmul.f32 %v533, %v1131
        %v1137 = vmul.f32 %v535, %v1131
        %v1138 = vmul.f32 %v536, %v1131
        %v1139 = vmul.f32 %v538, %v1131
        %v1140 = vmul.f32 %v539, %v1131
        %v1141 = vmul.f32 %v541, %v1131
        %v1142 = vmul.f32 %v542, %v1131
        %v1143 = vmul.f32 %v544, %v1131
        %v1144 = vmul.f32 %v545, %v1131
        %v1145 = vmul.f32 %v547, %v1131
        %v1146 = vmul.f32 %v548, %v1131
        %v1147 = vmul.f32 %v550, %v1131
        %v1148 = vmul.f32 %v551, %v1131
        %v1149 = vadd.f32 %v1112, %v1133
        %v1150 = vadd.f32 %v1113, %v1134
        %v1151 = vadd.f32 %v1114, %v1135
        %v1152 = vadd.f32 %v1115, %v1136
        %v1153 = vadd.f32 %v1116, %v1137
        %v1154 = vadd.f32 %v1117, %v1138
        %v1155 = vadd.f32 %v1118, %v1139
        %v1156 = vadd.f32 %v1119, %v1140
        %v1157 = vadd.f32 %v1120, %v1141
        %v1158 = vadd.f32 %v1121, %v1142
        %v1159 = vadd.f32 %v1122, %v1143
        %v1160 = vadd.f32 %v1123, %v1144
        %v1161 = vadd.f32 %v1124, %v1145
        %v1162 = vadd.f32 %v1125, %v1146
        %v1163 = vadd.f32 %v1126, %v1147
        %v1164 = vadd.f32 %v1127, %v1148
        %s1165 = scalar_lea.vmem [#allocation7], 7
        %v1166 = vld [vmem:[%s1165] sm:$0x1]
        %v1168 = vperm.slane %v1166, 0
        %v1170 = vmul.f32 %v529, %v1168
        %v1171 = vmul.f32 %v530, %v1168
        %v1172 = vmul.f32 %v531, %v1168
        %v1173 = vmul.f32 %v532, %v1168
        %v1174 = vmul.f32 %v533, %v1168
        %v1175 = vmul.f32 %v534, %v1168
        %v1176 = vmul.f32 %v535, %v1168
        %v1177 = vmul.f32 %v536, %v1168
        %v1178 = vmul.f32 %v537, %v1168
        %v1179 = vmul.f32 %v538, %v1168
        %v1180 = vmul.f32 %v539, %v1168
        %v1181 = vmul.f32 %v540, %v1168
        %v1182 = vmul.f32 %v541, %v1168
        %v1183 = vmul.f32 %v542, %v1168
        %v1184 = vmul.f32 %v543, %v1168
        %v1185 = vmul.f32 %v544, %v1168
        %v1186 = vmul.f32 %v545, %v1168
        %v1187 = vmul.f32 %v546, %v1168
        %v1188 = vmul.f32 %v547, %v1168
        %v1189 = vmul.f32 %v548, %v1168
        %v1190 = vmul.f32 %v549, %v1168
        %v1191 = vmul.f32 %v550, %v1168
        %v1192 = vmul.f32 %v551, %v1168
        %v1193 = vmul.f32 %v552, %v1168
        %v1218 = vrot.slane %v1170, 1
        %v1219 = vrot.slane %v1171, 1
        %v1220 = vsel %vm642, %v1218, %v1219
        %v1221 = vrot.slane %v1172, 1
        %v1222 = vsel %vm642, %v1219, %v1221
        %v1223 = vrot.slane %v1173, 1
        %v1224 = vrot.slane %v1174, 1
        %v1225 = vsel %vm642, %v1223, %v1224
        %v1226 = vrot.slane %v1175, 1
        %v1227 = vsel %vm642, %v1224, %v1226
        %v1228 = vrot.slane %v1176, 1
        %v1229 = vrot.slane %v1177, 1
        %v1230 = vsel %vm642, %v1228, %v1229
        %v1231 = vrot.slane %v1178, 1
        %v1232 = vsel %vm642, %v1229, %v1231
        %v1233 = vrot.slane %v1179, 1
        %v1234 = vrot.slane %v1180, 1
        %v1235 = vsel %vm642, %v1233, %v1234
        %v1236 = vrot.slane %v1181, 1
        %v1237 = vsel %vm642, %v1234, %v1236
        %v1238 = vrot.slane %v1182, 1
        %v1239 = vrot.slane %v1183, 1
        %v1240 = vsel %vm642, %v1238, %v1239
        %v1241 = vrot.slane %v1184, 1
        %v1242 = vsel %vm642, %v1239, %v1241
        %v1243 = vrot.slane %v1185, 1
        %v1244 = vrot.slane %v1186, 1
        %v1245 = vsel %vm642, %v1243, %v1244
        %v1246 = vrot.slane %v1187, 1
        %v1247 = vsel %vm642, %v1244, %v1246
        %v1248 = vrot.slane %v1188, 1
        %v1249 = vrot.slane %v1189, 1
        %v1250 = vsel %vm642, %v1248, %v1249
        %v1251 = vrot.slane %v1190, 1
        %v1252 = vsel %vm642, %v1249, %v1251
        %v1253 = vrot.slane %v1191, 1
        %v1254 = vrot.slane %v1192, 1
        %v1255 = vsel %vm642, %v1253, %v1254
        %v1256 = vrot.slane %v1193, 1
        %v1257 = vsel %vm642, %v1254, %v1256
        %v1274 = vadd.f32 %v1149, %v1220
        %v1275 = vadd.f32 %v1150, %v1222
        %v1276 = vadd.f32 %v1151, %v1225
        %v1277 = vadd.f32 %v1152, %v1227
        %v1278 = vadd.f32 %v1153, %v1230
        %v1279 = vadd.f32 %v1154, %v1232
        %v1280 = vadd.f32 %v1155, %v1235
        %v1281 = vadd.f32 %v1156, %v1237
        %v1282 = vadd.f32 %v1157, %v1240
        %v1283 = vadd.f32 %v1158, %v1242
        %v1284 = vadd.f32 %v1159, %v1245
        %v1285 = vadd.f32 %v1160, %v1247
        %v1286 = vadd.f32 %v1161, %v1250
        %v1287 = vadd.f32 %v1162, %v1252
        %v1288 = vadd.f32 %v1163, %v1255
        %v1289 = vadd.f32 %v1164, %v1257
        %s1290 = scalar_lea.vmem [#allocation7], 8
        %v1291 = vld [vmem:[%s1290] sm:$0x1]
        %v1293 = vperm.slane %v1291, 0
        %v1295 = vmul.f32 %v529, %v1293
        %v1296 = vmul.f32 %v530, %v1293
        %v1297 = vmul.f32 %v531, %v1293
        %v1298 = vmul.f32 %v532, %v1293
        %v1299 = vmul.f32 %v533, %v1293
        %v1300 = vmul.f32 %v534, %v1293
        %v1301 = vmul.f32 %v535, %v1293
        %v1302 = vmul.f32 %v536, %v1293
        %v1303 = vmul.f32 %v537, %v1293
        %v1304 = vmul.f32 %v538, %v1293
        %v1305 = vmul.f32 %v539, %v1293
        %v1306 = vmul.f32 %v540, %v1293
        %v1307 = vmul.f32 %v541, %v1293
        %v1308 = vmul.f32 %v542, %v1293
        %v1309 = vmul.f32 %v543, %v1293
        %v1310 = vmul.f32 %v544, %v1293
        %v1311 = vmul.f32 %v545, %v1293
        %v1312 = vmul.f32 %v546, %v1293
        %v1313 = vmul.f32 %v547, %v1293
        %v1314 = vmul.f32 %v548, %v1293
        %v1315 = vmul.f32 %v549, %v1293
        %v1316 = vmul.f32 %v550, %v1293
        %v1317 = vmul.f32 %v551, %v1293
        %v1318 = vmul.f32 %v552, %v1293
        %v1343 = vrot.slane %v1295, 2
        %v1344 = vrot.slane %v1296, 2
        %v1345 = vsel %vm768, %v1343, %v1344
        %v1346 = vrot.slane %v1297, 2
        %v1347 = vsel %vm768, %v1344, %v1346
        %v1348 = vrot.slane %v1298, 2
        %v1349 = vrot.slane %v1299, 2
        %v1350 = vsel %vm768, %v1348, %v1349
        %v1351 = vrot.slane %v1300, 2
        %v1352 = vsel %vm768, %v1349, %v1351
        %v1353 = vrot.slane %v1301, 2
        %v1354 = vrot.slane %v1302, 2
        %v1355 = vsel %vm768, %v1353, %v1354
        %v1356 = vrot.slane %v1303, 2
        %v1357 = vsel %vm768, %v1354, %v1356
        %v1358 = vrot.slane %v1304, 2
        %v1359 = vrot.slane %v1305, 2
        %v1360 = vsel %vm768, %v1358, %v1359
        %v1361 = vrot.slane %v1306, 2
        %v1362 = vsel %vm768, %v1359, %v1361
        %v1363 = vrot.slane %v1307, 2
        %v1364 = vrot.slane %v1308, 2
        %v1365 = vsel %vm768, %v1363, %v1364
        %v1366 = vrot.slane %v1309, 2
        %v1367 = vsel %vm768, %v1364, %v1366
        %v1368 = vrot.slane %v1310, 2
        %v1369 = vrot.slane %v1311, 2
        %v1370 = vsel %vm768, %v1368, %v1369
        %v1371 = vrot.slane %v1312, 2
        %v1372 = vsel %vm768, %v1369, %v1371
        %v1373 = vrot.slane %v1313, 2
        %v1374 = vrot.slane %v1314, 2
        %v1375 = vsel %vm768, %v1373, %v1374
        %v1376 = vrot.slane %v1315, 2
        %v1377 = vsel %vm768, %v1374, %v1376
        %v1378 = vrot.slane %v1316, 2
        %v1379 = vrot.slane %v1317, 2
        %v1380 = vsel %vm768, %v1378, %v1379
        %v1381 = vrot.slane %v1318, 2
        %v1382 = vsel %vm768, %v1379, %v1381
        %v1399 = vadd.f32 %v1274, %v1345
        %v1400 = vadd.f32 %v1275, %v1347
        %v1401 = vadd.f32 %v1276, %v1350
        %v1402 = vadd.f32 %v1277, %v1352
        %v1403 = vadd.f32 %v1278, %v1355
        %v1404 = vadd.f32 %v1279, %v1357
        %v1405 = vadd.f32 %v1280, %v1360
        %v1406 = vadd.f32 %v1281, %v1362
        %v1407 = vadd.f32 %v1282, %v1365
        %v1408 = vadd.f32 %v1283, %v1367
        %v1409 = vadd.f32 %v1284, %v1370
        %v1410 = vadd.f32 %v1285, %v1372
        %v1411 = vadd.f32 %v1286, %v1375
        %v1412 = vadd.f32 %v1287, %v1377
        %v1413 = vadd.f32 %v1288, %v1380
        %v1414 = vadd.f32 %v1289, %v1382
        %v1415 = vld [vmem:[%s3] sm:$0x1]
        %v1417 = vperm.slane %v1415, 0
        %v1419 = vadd.f32 %v1399, %v1417
        %v1420 = vadd.f32 %v1400, %v1417
        %v1421 = vadd.f32 %v1401, %v1417
        %v1422 = vadd.f32 %v1402, %v1417
        %v1423 = vadd.f32 %v1403, %v1417
        %v1424 = vadd.f32 %v1404, %v1417
        %v1425 = vadd.f32 %v1405, %v1417
        %v1426 = vadd.f32 %v1406, %v1417
        %v1427 = vadd.f32 %v1407, %v1417
        %v1428 = vadd.f32 %v1408, %v1417
        %v1429 = vadd.f32 %v1409, %v1417
        %v1430 = vadd.f32 %v1410, %v1417
        %v1431 = vadd.f32 %v1411, %v1417
        %v1432 = vadd.f32 %v1412, %v1417
        %v1433 = vadd.f32 %v1413, %v1417
        %v1434 = vadd.f32 %v1414, %v1417
        %v1435 = vmax.f32 %v1419, 0.0
        %v1436 = vmax.f32 %v1420, 0.0
        %v1437 = vmax.f32 %v1421, 0.0
        %v1438 = vmax.f32 %v1422, 0.0
        %v1439 = vmax.f32 %v1423, 0.0
        %v1440 = vmax.f32 %v1424, 0.0
        %v1441 = vmax.f32 %v1425, 0.0
        %v1442 = vmax.f32 %v1426, 0.0
        %v1443 = vmax.f32 %v1427, 0.0
        %v1444 = vmax.f32 %v1428, 0.0
        %v1445 = vmax.f32 %v1429, 0.0
        %v1446 = vmax.f32 %v1430, 0.0
        %v1447 = vmax.f32 %v1431, 0.0
        %v1448 = vmax.f32 %v1432, 0.0
        %v1449 = vmax.f32 %v1433, 0.0
        %v1450 = vmax.f32 %v1434, 0.0
        %v1451 = vmin.f32 %v1435, 6.0
        %v1452 = vmin.f32 %v1436, 6.0
        %v1453 = vmin.f32 %v1437, 6.0
        %v1454 = vmin.f32 %v1438, 6.0
        %v1455 = vmin.f32 %v1439, 6.0
        %v1456 = vmin.f32 %v1440, 6.0
        %v1457 = vmin.f32 %v1441, 6.0
        %v1458 = vmin.f32 %v1442, 6.0
        %v1459 = vmin.f32 %v1443, 6.0
        %v1460 = vmin.f32 %v1444, 6.0
        %v1461 = vmin.f32 %v1445, 6.0
        %v1462 = vmin.f32 %v1446, 6.0
        %v1463 = vmin.f32 %v1447, 6.0
        %v1464 = vmin.f32 %v1448, 6.0
        %v1465 = vmin.f32 %v1449, 6.0
        %v1466 = vmin.f32 %v1450, 6.0
        %v1467 = vld [vmem:[#allocation9] sm:$0xff]
        %v1468 = vld [vmem:[#allocation9 + $0x8] sm:$0xff]
        %v1469 = vld [vmem:[#allocation9 + $0x10] sm:$0xff]
        %v1470 = vld [vmem:[#allocation9 + $0x18] sm:$0xff]
        %v1471 = vld [vmem:[#allocation9 + $0x20] sm:$0xff]
        %v1472 = vld [vmem:[#allocation9 + $0x28] sm:$0xff]
        %v1473 = vld [vmem:[#allocation9 + $0x30] sm:$0xff]
        %v1474 = vld [vmem:[#allocation9 + $0x38] sm:$0xff]
        %v1475 = vld [vmem:[#allocation9 + $0x40] sm:$0xff]
        %v1476 = vld [vmem:[#allocation9 + $0x48] sm:$0xff]
        %v1477 = vld [vmem:[#allocation9 + $0x50] sm:$0xff]
        %v1478 = vld [vmem:[#allocation9 + $0x58] sm:$0xff]
        %v1479 = vld [vmem:[#allocation9 + $0x60] sm:$0xff]
        %v1480 = vld [vmem:[#allocation9 + $0x68] sm:$0xff]
        %v1481 = vld [vmem:[#allocation9 + $0x70] sm:$0xff]
        %v1482 = vld [vmem:[#allocation9 + $0x78] sm:$0xff]
        %v1483 = vld [vmem:[%s5] sm:$0x1]
        %v1485 = vperm.slane %v1483, 0
        %1487 = vmatpush.msra.mxu0 %v1482
        %1488 = vmatpush.msra.mxu0 %v1481
        %1489 = vmatpush.msra.mxu0 %v1480
        %1490 = vmatpush.msra.mxu0 %v1479
        %1491 = vmatpush.msra.mxu0 %v1478
        %1492 = vmatpush.msra.mxu0 %v1477
        %1493 = vmatpush.msra.mxu0 %v1476
        %1494 = vmatpush.msra.mxu0 %v1475
        %1495 = vmatpush.msra.mxu0 %v1474
        %1496 = vmatpush.msra.mxu0 %v1473
        %1497 = vmatpush.msra.mxu0 %v1472
        %1498 = vmatpush.msra.mxu0 %v1471
        %1499 = vmatpush.msra.mxu0 %v1470
        %1500 = vmatpush.msra.mxu0 %v1469
        %1501 = vmatpush.msra.mxu0 %v1468
        %1502 = vmatpush.msra.mxu0 %v1467
        %1503 = vmatmul.f32.gmra.mxu0 %v1451
        %v1504 = vpop.f32.mrf.mxu0
        %v1505 = vadd.f32 %v1485, %v1504
        %1506 = vmatmul.f32.gmra.mxu0 %v1452
        %v1507 = vpop.f32.mrf.mxu0
        %v1508 = vadd.f32 %v1485, %v1507
        %1509 = vmatmul.f32.gmra.mxu0 %v1453
        %v1510 = vpop.f32.mrf.mxu0
        %v1511 = vadd.f32 %v1485, %v1510
        %1512 = vmatmul.f32.gmra.mxu0 %v1454
        %v1513 = vpop.f32.mrf.mxu0
        %v1514 = vadd.f32 %v1485, %v1513
        %1515 = vmatmul.f32.gmra.mxu0 %v1455
        %v1516 = vpop.f32.mrf.mxu0
        %v1517 = vadd.f32 %v1485, %v1516
        %1518 = vmatmul.f32.gmra.mxu0 %v1456
        %v1519 = vpop.f32.mrf.mxu0
        %v1520 = vadd.f32 %v1485, %v1519
        %1521 = vmatmul.f32.gmra.mxu0 %v1457
        %v1522 = vpop.f32.mrf.mxu0
        %v1523 = vadd.f32 %v1485, %v1522
        %1524 = vmatmul.f32.gmra.mxu0 %v1458
        %v1525 = vpop.f32.mrf.mxu0
        %v1526 = vadd.f32 %v1485, %v1525
        %1527 = vmatmul.f32.gmra.mxu0 %v1459
        %v1528 = vpop.f32.mrf.mxu0
        %v1529 = vadd.f32 %v1485, %v1528
        %1530 = vmatmul.f32.gmra.mxu0 %v1460
        %v1531 = vpop.f32.mrf.mxu0
        %v1532 = vadd.f32 %v1485, %v1531
        %1533 = vmatmul.f32.gmra.mxu0 %v1461
        %v1534 = vpop.f32.mrf.mxu0
        %v1535 = vadd.f32 %v1485, %v1534
        %1536 = vmatmul.f32.gmra.mxu0 %v1462
        %v1537 = vpop.f32.mrf.mxu0
        %v1538 = vadd.f32 %v1485, %v1537
        %1539 = vmatmul.f32.gmra.mxu0 %v1463
        %v1540 = vpop.f32.mrf.mxu0
        %v1541 = vadd.f32 %v1485, %v1540
        %1542 = vmatmul.f32.gmra.mxu0 %v1464
        %v1543 = vpop.f32.mrf.mxu0
        %v1544 = vadd.f32 %v1485, %v1543
        %1545 = vmatmul.f32.gmra.mxu0 %v1465
        %v1546 = vpop.f32.mrf.mxu0
        %v1547 = vadd.f32 %v1485, %v1546
        %1548 = vmatmul.f32.gmra.mxu0 %v1466
        %v1549 = vpop.f32.mrf.mxu0
        %v1550 = vadd.f32 %v1485, %v1549
        %1551 = vdwg.mxu0
        %v1576 = vrot.slane %v343, 1
        %v1577 = vrot.slane %v344, 1
        %v1578 = vsel %vm642, %v1576, %v1577
        %v1579 = vrot.slane %v345, 1
        %v1580 = vsel %vm642, %v1577, %v1579
        %v1581 = vrot.slane %v346, 1
        %v1582 = vrot.slane %v347, 1
        %v1583 = vsel %vm642, %v1581, %v1582
        %v1584 = vrot.slane %v348, 1
        %v1585 = vsel %vm642, %v1582, %v1584
        %v1586 = vrot.slane %v349, 1
        %v1587 = vrot.slane %v350, 1
        %v1588 = vsel %vm642, %v1586, %v1587
        %v1589 = vrot.slane %v351, 1
        %v1590 = vsel %vm642, %v1587, %v1589
        %v1591 = vrot.slane %v352, 1
        %v1592 = vrot.slane %v353, 1
        %v1593 = vsel %vm642, %v1591, %v1592
        %v1594 = vrot.slane %v354, 1
        %v1595 = vsel %vm642, %v1592, %v1594
        %v1596 = vrot.slane %v355, 1
        %v1597 = vrot.slane %v356, 1
        %v1598 = vsel %vm642, %v1596, %v1597
        %v1599 = vrot.slane %v357, 1
        %v1600 = vsel %vm642, %v1597, %v1599
        %v1601 = vrot.slane %v358, 1
        %v1602 = vrot.slane %v359, 1
        %v1603 = vsel %vm642, %v1601, %v1602
        %v1604 = vrot.slane %v360, 1
        %v1605 = vsel %vm642, %v1602, %v1604
        %v1606 = vrot.slane %v361, 1
        %v1607 = vrot.slane %v362, 1
        %v1608 = vsel %vm642, %v1606, %v1607
        %v1609 = vrot.slane %v363, 1
        %v1610 = vsel %vm642, %v1607, %v1609
        %v1611 = vrot.slane %v364, 1
        %v1612 = vrot.slane %v365, 1
        %v1613 = vsel %vm642, %v1611, %v1612
        %v1614 = vrot.slane %v366, 1
        %v1615 = vsel %vm642, %v1612, %v1614
        %v1632 = vadd.f32 %v1505, %v1578
        %v1633 = vadd.f32 %v1508, %v1580
        %v1634 = vadd.f32 %v1511, %v1583
        %v1635 = vadd.f32 %v1514, %v1585
        %v1636 = vadd.f32 %v1517, %v1588
        %v1637 = vadd.f32 %v1520, %v1590
        %v1638 = vadd.f32 %v1523, %v1593
        %v1639 = vadd.f32 %v1526, %v1595
        %v1640 = vadd.f32 %v1529, %v1598
        %v1641 = vadd.f32 %v1532, %v1600
        %v1642 = vadd.f32 %v1535, %v1603
        %v1643 = vadd.f32 %v1538, %v1605
        %v1644 = vadd.f32 %v1541, %v1608
        %v1645 = vadd.f32 %v1544, %v1610
        %v1646 = vadd.f32 %v1547, %v1613
        %v1647 = vadd.f32 %v1550, %v1615
        %1648 = vst [vmem:[%s267] sm:$0xff] %v1632
        %1649 = vst [vmem:[%s267 + $0x8] sm:$0xff] %v1633
        %1650 = vst [vmem:[%s267 + $0x10] sm:$0xff] %v1634
        %1651 = vst [vmem:[%s267 + $0x18] sm:$0xff] %v1635
        %1652 = vst [vmem:[%s267 + $0x20] sm:$0xff] %v1636
        %1653 = vst [vmem:[%s267 + $0x28] sm:$0xff] %v1637
        %1654 = vst [vmem:[%s267 + $0x30] sm:$0xff] %v1638
        %1655 = vst [vmem:[%s267 + $0x38] sm:$0xff] %v1639
        %1656 = vst [vmem:[%s267 + $0x40] sm:$0xff] %v1640
        %1657 = vst [vmem:[%s267 + $0x48] sm:$0xff] %v1641
        %1658 = vst [vmem:[%s267 + $0x50] sm:$0xff] %v1642
        %1659 = vst [vmem:[%s267 + $0x58] sm:$0xff] %v1643
        %1660 = vst [vmem:[%s267 + $0x60] sm:$0xff] %v1644
        %1661 = vst [vmem:[%s267 + $0x68] sm:$0xff] %v1645
        %1662 = vst [vmem:[%s267 + $0x70] sm:$0xff] %v1646
        %1663 = vst [vmem:[%s267 + $0x78] sm:$0xff] %v1647
        %s1664 = sand.u32 %s149, 1
        %s1665 = scalar_lea.sflag [#allocation6], %s1664
        %s1666 = sand.u32 %s149, 1
        %s1667 = smul.addr %s1666, 128
        %s1668 = scalar_lea.vmem [#allocation10], %s1667
        // Predicated region
        $region69: #{tpu_custom_call.1} parent=39 // pred_check
          %p1669 = pneg %p159
        $region70: #{tpu_custom_call.1} parent=39 // pred_check_branch
          %1671 = sbr.rel (%p1669) target = $region72
        $region71: #{tpu_custom_call.1} parent=39 // pred_region
          %s1672 = smul.u32 16, %s27
          %1674 = vsyncadd %s1665, 0
          %s1675 = smul.addr %s26, 32
          %s1676 = sadd.s32 %s1672, %s1675
          %s1677 = smul.addr %s1676, 8
          %s1678 = scalar_lea.hbm %s6, %s1677
          %s1679 = sshll.u32 %s1668, 4
          %s1680 = int_to_ptr.vmem [resolvable:$true] %s1679
          %s1681 = sshll.u32 %s1678, 4
          %s1682 = int_to_ptr.hbm [resolvable:$true] %s1681
          %1687 = dma.vmem_to_hbm [thread:$0]  %s1680, 2048, %s1682, %s1665, 128, 128, 8
        $region72: #{tpu_custom_call.1} parent=39 // pred_fallthru
          _
      $region40: #{tpu_custom_call.1} parent=5 // pred_fallthru
        _
      %p1688 = scmp.le.s32.totalorder 2, %s17
      // Predicated region
      $region73: #{tpu_custom_call.1} parent=5 // pred_check
        %p1689 = pneg %p1688
      $region74: #{tpu_custom_call.1} parent=5 // pred_check_branch
        %1691 = sbr.rel (%p1689) target = $region76
      $region75: #{tpu_custom_call.1} parent=5 // pred_region
        %s1692 = ssub.s32 %s17, 2
        // Predicated region
        $region77: #{tpu_custom_call.1} parent=75 // pred_check
          %p1693 = pneg %p165
        $region78: #{tpu_custom_call.1} parent=75 // pred_check_branch
          %1695 = sbr.rel (%p1693) target = $region80
        $region79: #{tpu_custom_call.1} parent=75 // pred_region
          %s1696 = sand.u32 %s150, 1
          %s1697 = scalar_lea.sflag [#allocation6], %s1696
          %s1698 = sand.u32 %s150, 1
          %s1699 = smul.addr %s1698, 128
          %s1700 = scalar_lea.vmem [#allocation10], %s1699
          %1702 = dma.done %s1697, 2048
        $region80: #{tpu_custom_call.1} parent=75 // pred_fallthru
          _
      $region76: #{tpu_custom_call.1} parent=5 // pred_fallthru
        _
    $region6: #{tpu_custom_call.1} parent=1 // loop_footer
      %s21 = sadd.s32 1, %s17
    $region7: #{tpu_custom_call.1} parent=1 // loop_footer_branch
      %16 = sbr.rel target = $region3
    $region8: #{tpu_custom_call.1} parent=1 // loop_exit
      _
    %1703 = vsyncpa [#allocation5], 1
    %s1704 = scalar_lea.sflag [#allocation5], 1
    %1705 = vsyncpa %s1704, 1
    %1706 = vsyncpa [#allocation8], 1
    %1707 = vsyncpa [#allocation6], 1
    %s1708 = scalar_lea.sflag [#allocation6], 1
    %1709 = vsyncpa %s1708, 1
  %1710 = vsyncmov [#allocation3]
  %s1711 = vpop.sfrf %1710
  %p1712 = scmp.eq.s32.totalorder %s1711, 0
  %p1713 = pneg %p1712
  %1715 = shalt.err (%p1713)
  %s1716 = scalar_lea.sflag [#allocation3], 1
  %1717 = vsyncmov %s1716
  %s1718 = vpop.sfrf %1717
  %p1719 = scmp.eq.s32.totalorder %s1718, 0
  %p1720 = pneg %p1719
  %1722 = shalt.err (%p1720)

</llo_original>
